<compile_context>
chip_gen: v7x
topology: tpu7x:2x2x1
jax: 0.10.0
libtpu: 0.0.40
codegen_flags: <defaults>
</compile_context>

<pallas_src>
import functools
import math

import jax
import jax.numpy as jnp
from jax.experimental import pallas as pl
from jax.experimental.pallas import tpu as pltpu


def _round_up(v, m):
    return (v + m - 1) // m * m


def _linear_attention_kernel(x_ref, wqkv_ref, wout_ref, bias_ref, o_ref, attn_ref,
                             *, heads, dim_head, n_valid):
    # x_ref    : (1, C, N)     activations for batch b
    # wqkv_ref : (3*H*D, C)    QKV 1x1-conv weight, rows ordered [q | k | v], head-major
    # wout_ref : (C, H*D)      output 1x1-conv weight
    # bias_ref : (C, 1)        output 1x1-conv bias (f32)
    # o_ref    : (1, C, N)     output for batch b
    # attn_ref : (H*D, N) f32  scratch holding per-head attention outputs
    d = dim_head
    hd = heads * d

    xb = x_ref[0]                                                        # (C, N)

    # Fused all-heads QKV projection (1x1 conv == matmul), f32 accumulation on the MXU.
    qkv = jnp.dot(wqkv_ref[...], xb, preferred_element_type=jnp.float32)  # (3HD, N)
    q_all = qkv[0 * hd:1 * hd, :]
    k_all = qkv[1 * hd:2 * hd, :]
    v_all = qkv[2 * hd:3 * hd, :]

    n_pad = xb.shape[-1]
    if n_valid != n_pad:
        # Padded spatial columns must not contribute to the softmax over N.
        col = jax.lax.broadcasted_iota(jnp.int32, (1, n_pad), 1)
        k_all = jnp.where(col < n_valid, k_all, jnp.float32(-1e30))

    # Short static head loop (H is small): softmax(k) over spatial, context, ctx @ q.
    # dim_head is a multiple of 8, so every slice below is sublane-tile aligned.
    for h in range(heads):
        lo, hi = h * d, (h + 1) * d
        k = k_all[lo:hi, :]                                              # (D, N)
        v = v_all[lo:hi, :]
        q = q_all[lo:hi, :]

        # Numerically-stable softmax statistics of k along the spatial axis.
        m = jnp.max(k, axis=-1, keepdims=True)                           # (D, 1) XLU
        e = jnp.exp(k - m)                                               # (D, N) EUP
        l = jnp.sum(e, axis=-1, keepdims=True)                           # (D, 1) XLU

        # ctx = softmax(k) @ v^T computed as (e @ v^T) scaled by 1/l: a (D, D) multiply
        # instead of a (D, N) divide -- exact same math, no per-element normalization.
        ctx = jax.lax.dot_general(e, v, (((1,), (1,)), ((), ())),
                                  preferred_element_type=jnp.float32)    # (D, D)
        ctx = ctx * pl.reciprocal(l, approx=False)

        # Per-head attention output = ctx @ q -> (D, N), staged in the (HD, N) scratch.
        attn_ref[lo:hi, :] = jnp.dot(ctx, q, preferred_element_type=jnp.float32)

    # Output 1x1 conv over all heads in a single (C, HD) @ (HD, N) matmul + bias.
    out = jnp.dot(wout_ref[...], attn_ref[...], preferred_element_type=jnp.float32)
    o_ref[0] = (out + bias_ref[...]).astype(o_ref.dtype)


def linear_attention(x, w_qkv, w_out, b_out, *, heads, dim_head):
    """x: (B, C, *spatial); w_qkv: (3*heads*dim_head, C); w_out: (C, heads*dim_head);
    b_out: (C,).  Returns (B, C, *spatial)."""
    b, c, *spatial = x.shape
    n = math.prod(spatial)
    hd = heads * dim_head
    assert w_qkv.shape == (3 * hd, c) and w_out.shape == (c, hd) and b_out.shape == (c,)

    # Pad spatial to a lane multiple (128) and channels to an f32 sublane multiple (8)
    # so every (C, N)/(D, N) tile is (8, 128)-aligned and output stores are unmasked.
    n_pad = max(_round_up(n, 128), 128)
    c_pad = max(_round_up(c, 8), 8)

    x3 = x.reshape(b, c, n)
    if n_pad != n or c_pad != c:
        x3 = jnp.pad(x3, ((0, 0), (0, c_pad - c), (0, n_pad - n)))
    wqkv_p = w_qkv if c_pad == c else jnp.pad(w_qkv, ((0, 0), (0, c_pad - c)))
    wout_p = w_out if c_pad == c else jnp.pad(w_out, ((0, c_pad - c), (0, 0)))
    bias2d = b_out.reshape(c, 1).astype(jnp.float32)
    if c_pad != c:
        bias2d = jnp.pad(bias2d, ((0, c_pad - c), (0, 0)))

    itemsize = x.dtype.itemsize
    w_itemsize = w_qkv.dtype.itemsize

    # Rough VMEM residency: x/out double-buffered + f32 qkv intermediate + attn scratch
    # + resident weights/bias.  Clamp to v7x's 64 MiB physical VMEM.
    vmem_est = (2 * 2 * c_pad * n_pad * itemsize
                + 4 * (3 * hd + hd) * n_pad
                + w_itemsize * (3 * hd * c_pad + c_pad * hd) + 4 * c_pad)
    vmem_limit = int(min(64 << 20, max(2 * vmem_est + (4 << 20), 32 << 20)))

    flops = 2 * b * n_pad * (3 * hd * c_pad + 2 * hd * dim_head + c_pad * hd)
    bytes_accessed = (itemsize * 2 * b * c_pad * n_pad
                      + w_itemsize * (3 * hd * c_pad + c_pad * hd) + 4 * c_pad)

    kernel = functools.partial(_linear_attention_kernel,
                               heads=heads, dim_head=dim_head, n_valid=n)

    out3d = pl.pallas_call(
        kernel,
        out_shape=jax.ShapeDtypeStruct((b, c_pad, n_pad), x.dtype),
        grid_spec=pltpu.PrefetchScalarGridSpec(
            num_scalar_prefetch=0,
            grid=(b,),
            in_specs=[
                pl.BlockSpec((1, c_pad, n_pad), lambda i: (i, 0, 0)),   # x[b]
                pl.BlockSpec((3 * hd, c_pad), lambda i: (0, 0)),        # QKV weight (resident)
                pl.BlockSpec((c_pad, hd), lambda i: (0, 0)),            # out-proj weight (resident)
                pl.BlockSpec((c_pad, 1), lambda i: (0, 0)),             # out-proj bias (resident)
            ],
            out_specs=pl.BlockSpec((1, c_pad, n_pad), lambda i: (i, 0, 0)),
            scratch_shapes=[pltpu.VMEM((hd, n_pad), jnp.float32)],
        ),
        compiler_params=pltpu.CompilerParams(
            dimension_semantics=("parallel",),
            vmem_limit_bytes=vmem_limit),
        cost_estimate=pl.CostEstimate(
            flops=flops,
            transcendentals=b * hd * n_pad,
            bytes_accessed=bytes_accessed),
    )(x3, wqkv_p, wout_p, bias2d)

    return out3d[:, :c, :n].reshape(b, c, *spatial)


if __name__ == "__main__":
    key = jax.random.PRNGKey(0)
    k_x, k_wq, k_wo, k_bo = jax.random.split(key, 4)

    batch, channels, hs, ws = 2, 8, 16, 16
    heads, dim_head = 4, 32
    hd = heads * dim_head

    # 1x1-conv init mimicking nn.Conv2d: uniform(-1/sqrt(fan_in), 1/sqrt(fan_in)).
    bq = 1.0 / math.sqrt(channels)
    bo = 1.0 / math.sqrt(hd)
    w_qkv = jax.random.uniform(k_wq, (3 * hd, channels), jnp.float32, -bq, bq)
    w_out = jax.random.uniform(k_wo, (channels, hd), jnp.float32, -bo, bo)
    b_out = jax.random.uniform(k_bo, (channels,), jnp.float32, -bo, bo)

    x = jax.random.normal(k_x, (batch, channels, hs, ws), jnp.float32)

    out = linear_attention(x, w_qkv, w_out, b_out, heads=heads, dim_head=dim_head)
    out = jax.block_until_ready(out)

    # Pure-JAX reference of the PyTorch forward.
    with jax.default_matmul_precision("highest"):
        n = hs * ws
        x3 = x.reshape(batch, channels, n)
        qkv = jnp.einsum("oc,bcn->bon", w_qkv, x3).reshape(batch, 3, heads, dim_head, n)
        q, k, v = qkv[:, 0], qkv[:, 1], qkv[:, 2]
        k = jax.nn.softmax(k, axis=-1)
        ctx = jnp.einsum("bhdn,bhen->bhde", k, v)        # k @ v^T
        o = jnp.einsum("bhde,bhen->bhdn", ctx, q)        # (k @ v^T) @ q
        o = o.reshape(batch, hd, n)
        ref = jnp.einsum("oi,bin->bon", w_out, o) + b_out[None, :, None]
        ref = ref.reshape(batch, channels, hs, ws)

    assert out.shape == (batch, channels, hs, ws)
    err = jnp.max(jnp.abs(out - ref))
    assert jnp.allclose(out, ref, atol=2e-3, rtol=2e-3), f"mismatch vs reference: max abs err {err}"
    print("KERNEL_OK")
</pallas_src>

<mosaic_0001>
module attributes {stable_mosaic.version = 11 : i64} {
  func.func @_linear_attention_kernel(%arg0: i32, %arg1: memref<1x8x256xf32, #tpu.memory_space<vmem>>, %arg2: memref<384x8xf32, #tpu.memory_space<vmem>>, %arg3: memref<8x128xf32, #tpu.memory_space<vmem>>, %arg4: memref<8x1xf32, #tpu.memory_space<vmem>>, %arg5: memref<1x8x256xf32, #tpu.memory_space<vmem>>, %arg6: memref<128x256xf32, #tpu.memory_space<vmem>>) attributes {dimension_semantics = [#tpu.dimension_semantics<parallel>], iteration_bounds = array<i64: 2>, scalar_prefetch = 0 : i64, scratch_operands = 1 : i64, tpu.core_type = #tpu.core_type<tc>, window_params = [{transform_indices = @transform_0, window_bounds = array<i64: 1, 8, 256>}, {pipeline_mode = #tpu.pipeline_mode<synchronous>, transform_indices = @transform_1, window_bounds = array<i64: 384, 8>}, {pipeline_mode = #tpu.pipeline_mode<synchronous>, transform_indices = @transform_2, window_bounds = array<i64: 8, 128>}, {pipeline_mode = #tpu.pipeline_mode<synchronous>, transform_indices = @transform_3, window_bounds = array<i64: 8, 1>}, {transform_indices = @transform_4, window_bounds = array<i64: 1, 8, 256>}]} {
    %c0 = arith.constant 0 : index
    %c0_0 = arith.constant 0 : index
    %c0_1 = arith.constant 0 : index
    %0 = vector.load %arg1[%c0, %c0_0, %c0_1] : memref<1x8x256xf32, #tpu.memory_space<vmem>>, vector<1x8x256xf32>
    %1 = vector.shape_cast %0 : vector<1x8x256xf32> to vector<8x256xf32>
    %c0_2 = arith.constant 0 : index
    %c0_3 = arith.constant 0 : index
    %2 = vector.load %arg2[%c0_2, %c0_3] : memref<384x8xf32, #tpu.memory_space<vmem>>, vector<384x8xf32>
    %cst = arith.constant dense<0.000000e+00> : vector<384x256xf32>
    %3 = tpu.matmul %2, %1, %cst {dimension_numbers = #tpu.dot_dimension_numbers<[1], [0], [0], [1], [0, 0, 1, 1], [], []>} : vector<384x8xf32>, vector<8x256xf32>, vector<384x256xf32> -> vector<384x256xf32>
    %4 = vector.extract_strided_slice %3 {offsets = [0, 0], sizes = [128, 256], strides = [1, 1]} : vector<384x256xf32> to vector<128x256xf32>
    %5 = vector.extract_strided_slice %3 {offsets = [128, 0], sizes = [128, 256], strides = [1, 1]} : vector<384x256xf32> to vector<128x256xf32>
    %6 = vector.extract_strided_slice %3 {offsets = [256, 0], sizes = [128, 256], strides = [1, 1]} : vector<384x256xf32> to vector<128x256xf32>
    %7 = vector.extract_strided_slice %5 {offsets = [0, 0], sizes = [32, 256], strides = [1, 1]} : vector<128x256xf32> to vector<32x256xf32>
    %8 = vector.extract_strided_slice %6 {offsets = [0, 0], sizes = [32, 256], strides = [1, 1]} : vector<128x256xf32> to vector<32x256xf32>
    %9 = vector.extract_strided_slice %4 {offsets = [0, 0], sizes = [32, 256], strides = [1, 1]} : vector<128x256xf32> to vector<32x256xf32>
    %cst_4 = arith.constant dense<0xFF800000> : vector<32xf32>
    %10 = vector.multi_reduction <maximumf>, %7, %cst_4 [1] : vector<32x256xf32> to vector<32xf32>
    %11 = vector.shape_cast %10 : vector<32xf32> to vector<32x1xf32>
    %12 = vector.broadcast %11 : vector<32x1xf32> to vector<32x256xf32>
    %13 = arith.subf %7, %12 : vector<32x256xf32>
    %14 = math.exp %13 : vector<32x256xf32>
    %cst_5 = arith.constant dense<0.000000e+00> : vector<32xf32>
    %15 = vector.multi_reduction <add>, %14, %cst_5 [1] : vector<32x256xf32> to vector<32xf32>
    %16 = vector.shape_cast %15 : vector<32xf32> to vector<32x1xf32>
    %cst_6 = arith.constant dense<0.000000e+00> : vector<32x32xf32>
    %17 = tpu.matmul %14, %8, %cst_6 {dimension_numbers = #tpu.dot_dimension_numbers<[1], [1], [0], [0], [0, 0, 1, 0], [], []>} : vector<32x256xf32>, vector<32x256xf32>, vector<32x32xf32> -> vector<32x32xf32>
    %18 = tpu.reciprocal %16 : vector<32x1xf32> -> vector<32x1xf32>
    %19 = vector.broadcast %18 : vector<32x1xf32> to vector<32x32xf32>
    %20 = arith.mulf %17, %19 : vector<32x32xf32>
    %cst_7 = arith.constant dense<0.000000e+00> : vector<32x256xf32>
    %21 = tpu.matmul %20, %9, %cst_7 {dimension_numbers = #tpu.dot_dimension_numbers<[1], [0], [0], [1], [0, 0, 1, 1], [], []>} : vector<32x32xf32>, vector<32x256xf32>, vector<32x256xf32> -> vector<32x256xf32>
    %c0_8 = arith.constant 0 : index
    %c0_9 = arith.constant 0 : index
    %22 = vector.load %arg6[%c0_8, %c0_9] : memref<128x256xf32, #tpu.memory_space<vmem>>, vector<32x256xf32>
    tpu.vector_store %arg6[%c0_8, %c0_9], %21 {strides = array<i32>} : memref<128x256xf32, #tpu.memory_space<vmem>>, vector<32x256xf32>,
    %23 = vector.extract_strided_slice %5 {offsets = [32, 0], sizes = [32, 256], strides = [1, 1]} : vector<128x256xf32> to vector<32x256xf32>
    %24 = vector.extract_strided_slice %6 {offsets = [32, 0], sizes = [32, 256], strides = [1, 1]} : vector<128x256xf32> to vector<32x256xf32>
    %25 = vector.extract_strided_slice %4 {offsets = [32, 0], sizes = [32, 256], strides = [1, 1]} : vector<128x256xf32> to vector<32x256xf32>
    %cst_10 = arith.constant dense<0xFF800000> : vector<32xf32>
    %26 = vector.multi_reduction <maximumf>, %23, %cst_10 [1] : vector<32x256xf32> to vector<32xf32>
    %27 = vector.shape_cast %26 : vector<32xf32> to vector<32x1xf32>
    %28 = vector.broadcast %27 : vector<32x1xf32> to vector<32x256xf32>
    %29 = arith.subf %23, %28 : vector<32x256xf32>
    %30 = math.exp %29 : vector<32x256xf32>
    %cst_11 = arith.constant dense<0.000000e+00> : vector<32xf32>
    %31 = vector.multi_reduction <add>, %30, %cst_11 [1] : vector<32x256xf32> to vector<32xf32>
    %32 = vector.shape_cast %31 : vector<32xf32> to vector<32x1xf32>
    %cst_12 = arith.constant dense<0.000000e+00> : vector<32x32xf32>
    %33 = tpu.matmul %30, %24, %cst_12 {dimension_numbers = #tpu.dot_dimension_numbers<[1], [1], [0], [0], [0, 0, 1, 0], [], []>} : vector<32x256xf32>, vector<32x256xf32>, vector<32x32xf32> -> vector<32x32xf32>
    %34 = tpu.reciprocal %32 : vector<32x1xf32> -> vector<32x1xf32>
    %35 = vector.broadcast %34 : vector<32x1xf32> to vector<32x32xf32>
    %36 = arith.mulf %33, %35 : vector<32x32xf32>
    %cst_13 = arith.constant dense<0.000000e+00> : vector<32x256xf32>
    %37 = tpu.matmul %36, %25, %cst_13 {dimension_numbers = #tpu.dot_dimension_numbers<[1], [0], [0], [1], [0, 0, 1, 1], [], []>} : vector<32x32xf32>, vector<32x256xf32>, vector<32x256xf32> -> vector<32x256xf32>
    %c32 = arith.constant 32 : index
    %c0_14 = arith.constant 0 : index
    %38 = vector.load %arg6[%c32, %c0_14] : memref<128x256xf32, #tpu.memory_space<vmem>>, vector<32x256xf32>
    tpu.vector_store %arg6[%c32, %c0_14], %37 {strides = array<i32>} : memref<128x256xf32, #tpu.memory_space<vmem>>, vector<32x256xf32>,
    %39 = vector.extract_strided_slice %5 {offsets = [64, 0], sizes = [32, 256], strides = [1, 1]} : vector<128x256xf32> to vector<32x256xf32>
    %40 = vector.extract_strided_slice %6 {offsets = [64, 0], sizes = [32, 256], strides = [1, 1]} : vector<128x256xf32> to vector<32x256xf32>
    %41 = vector.extract_strided_slice %4 {offsets = [64, 0], sizes = [32, 256], strides = [1, 1]} : vector<128x256xf32> to vector<32x256xf32>
    %cst_15 = arith.constant dense<0xFF800000> : vector<32xf32>
    %42 = vector.multi_reduction <maximumf>, %39, %cst_15 [1] : vector<32x256xf32> to vector<32xf32>
    %43 = vector.shape_cast %42 : vector<32xf32> to vector<32x1xf32>
    %44 = vector.broadcast %43 : vector<32x1xf32> to vector<32x256xf32>
    %45 = arith.subf %39, %44 : vector<32x256xf32>
    %46 = math.exp %45 : vector<32x256xf32>
    %cst_16 = arith.constant dense<0.000000e+00> : vector<32xf32>
    %47 = vector.multi_reduction <add>, %46, %cst_16 [1] : vector<32x256xf32> to vector<32xf32>
    %48 = vector.shape_cast %47 : vector<32xf32> to vector<32x1xf32>
    %cst_17 = arith.constant dense<0.000000e+00> : vector<32x32xf32>
    %49 = tpu.matmul %46, %40, %cst_17 {dimension_numbers = #tpu.dot_dimension_numbers<[1], [1], [0], [0], [0, 0, 1, 0], [], []>} : vector<32x256xf32>, vector<32x256xf32>, vector<32x32xf32> -> vector<32x32xf32>
    %50 = tpu.reciprocal %48 : vector<32x1xf32> -> vector<32x1xf32>
    %51 = vector.broadcast %50 : vector<32x1xf32> to vector<32x32xf32>
    %52 = arith.mulf %49, %51 : vector<32x32xf32>
    %cst_18 = arith.constant dense<0.000000e+00> : vector<32x256xf32>
    %53 = tpu.matmul %52, %41, %cst_18 {dimension_numbers = #tpu.dot_dimension_numbers<[1], [0], [0], [1], [0, 0, 1, 1], [], []>} : vector<32x32xf32>, vector<32x256xf32>, vector<32x256xf32> -> vector<32x256xf32>
    %c64 = arith.constant 64 : index
    %c0_19 = arith.constant 0 : index
    %54 = vector.load %arg6[%c64, %c0_19] : memref<128x256xf32, #tpu.memory_space<vmem>>, vector<32x256xf32>
    tpu.vector_store %arg6[%c64, %c0_19], %53 {strides = array<i32>} : memref<128x256xf32, #tpu.memory_space<vmem>>, vector<32x256xf32>,
    %55 = vector.extract_strided_slice %5 {offsets = [96, 0], sizes = [32, 256], strides = [1, 1]} : vector<128x256xf32> to vector<32x256xf32>
    %56 = vector.extract_strided_slice %6 {offsets = [96, 0], sizes = [32, 256], strides = [1, 1]} : vector<128x256xf32> to vector<32x256xf32>
    %57 = vector.extract_strided_slice %4 {offsets = [96, 0], sizes = [32, 256], strides = [1, 1]} : vector<128x256xf32> to vector<32x256xf32>
    %cst_20 = arith.constant dense<0xFF800000> : vector<32xf32>
    %58 = vector.multi_reduction <maximumf>, %55, %cst_20 [1] : vector<32x256xf32> to vector<32xf32>
    %59 = vector.shape_cast %58 : vector<32xf32> to vector<32x1xf32>
    %60 = vector.broadcast %59 : vector<32x1xf32> to vector<32x256xf32>
    %61 = arith.subf %55, %60 : vector<32x256xf32>
    %62 = math.exp %61 : vector<32x256xf32>
    %cst_21 = arith.constant dense<0.000000e+00> : vector<32xf32>
    %63 = vector.multi_reduction <add>, %62, %cst_21 [1] : vector<32x256xf32> to vector<32xf32>
    %64 = vector.shape_cast %63 : vector<32xf32> to vector<32x1xf32>
    %cst_22 = arith.constant dense<0.000000e+00> : vector<32x32xf32>
    %65 = tpu.matmul %62, %56, %cst_22 {dimension_numbers = #tpu.dot_dimension_numbers<[1], [1], [0], [0], [0, 0, 1, 0], [], []>} : vector<32x256xf32>, vector<32x256xf32>, vector<32x32xf32> -> vector<32x32xf32>
    %66 = tpu.reciprocal %64 : vector<32x1xf32> -> vector<32x1xf32>
    %67 = vector.broadcast %66 : vector<32x1xf32> to vector<32x32xf32>
    %68 = arith.mulf %65, %67 : vector<32x32xf32>
    %cst_23 = arith.constant dense<0.000000e+00> : vector<32x256xf32>
    %69 = tpu.matmul %68, %57, %cst_23 {dimension_numbers = #tpu.dot_dimension_numbers<[1], [0], [0], [1], [0, 0, 1, 1], [], []>} : vector<32x32xf32>, vector<32x256xf32>, vector<32x256xf32> -> vector<32x256xf32>
    %c96 = arith.constant 96 : index
    %c0_24 = arith.constant 0 : index
    %70 = vector.load %arg6[%c96, %c0_24] : memref<128x256xf32, #tpu.memory_space<vmem>>, vector<32x256xf32>
    tpu.vector_store %arg6[%c96, %c0_24], %69 {strides = array<i32>} : memref<128x256xf32, #tpu.memory_space<vmem>>, vector<32x256xf32>,
    %c0_25 = arith.constant 0 : index
    %c0_26 = arith.constant 0 : index
    %71 = vector.load %arg3[%c0_25, %c0_26] : memref<8x128xf32, #tpu.memory_space<vmem>>, vector<8x128xf32>
    %c0_27 = arith.constant 0 : index
    %c0_28 = arith.constant 0 : index
    %72 = vector.load %arg6[%c0_27, %c0_28] : memref<128x256xf32, #tpu.memory_space<vmem>>, vector<128x256xf32>
    %cst_29 = arith.constant dense<0.000000e+00> : vector<8x256xf32>
    %73 = tpu.matmul %71, %72, %cst_29 {dimension_numbers = #tpu.dot_dimension_numbers<[1], [0], [0], [1], [0, 0, 1, 1], [], []>} : vector<8x128xf32>, vector<128x256xf32>, vector<8x256xf32> -> vector<8x256xf32>
    %c0_30 = arith.constant 0 : index
    %c0_31 = arith.constant 0 : index
    %74 = vector.load %arg4[%c0_30, %c0_31] : memref<8x1xf32, #tpu.memory_space<vmem>>, vector<8x1xf32>
    %75 = vector.broadcast %74 : vector<8x1xf32> to vector<8x256xf32>
    %76 = arith.addf %73, %75 : vector<8x256xf32>
    %c0_32 = arith.constant 0 : index
    %c0_33 = arith.constant 0 : index
    %c0_34 = arith.constant 0 : index
    %77 = vector.load %arg5[%c0_32, %c0_33, %c0_34] : memref<1x8x256xf32, #tpu.memory_space<vmem>>, vector<1x8x256xf32>
    %78 = vector.shape_cast %77 : vector<1x8x256xf32> to vector<8x256xf32>
    %79 = vector.shape_cast %76 : vector<8x256xf32> to vector<1x8x256xf32>
    tpu.vector_store %arg5[%c0_32, %c0_33, %c0_34], %79 {strides = array<i32>} : memref<1x8x256xf32, #tpu.memory_space<vmem>>, vector<1x8x256xf32>,
    return
  }
  func.func @transform_0(%arg0: i32) -> (i32, i32, i32) {
    %c0_i32 = arith.constant 0 : i32
    %c0_i32_0 = arith.constant 0 : i32
    %c0_i32_1 = arith.constant 0 : i32
    return %arg0, %c0_i32, %c0_i32_0 : i32, i32, i32
  }
  func.func @transform_1(%arg0: i32) -> (i32, i32) {
    %c0_i32 = arith.constant 0 : i32
    %c0_i32_0 = arith.constant 0 : i32
    %c0_i32_1 = arith.constant 0 : i32
    return %c0_i32, %c0_i32_0 : i32, i32
  }
  func.func @transform_2(%arg0: i32) -> (i32, i32) {
    %c0_i32 = arith.constant 0 : i32
    %c0_i32_0 = arith.constant 0 : i32
    %c0_i32_1 = arith.constant 0 : i32
    return %c0_i32, %c0_i32_0 : i32, i32
  }
  func.func @transform_3(%arg0: i32) -> (i32, i32) {
    %c0_i32 = arith.constant 0 : i32
    %c0_i32_0 = arith.constant 0 : i32
    %c0_i32_1 = arith.constant 0 : i32
    return %c0_i32, %c0_i32_0 : i32, i32
  }
  func.func @transform_4(%arg0: i32) -> (i32, i32, i32) {
    %c0_i32 = arith.constant 0 : i32
    %c0_i32_0 = arith.constant 0 : i32
    %c0_i32_1 = arith.constant 0 : i32
    return %arg0, %c0_i32, %c0_i32_0 : i32, i32, i32
  }
}

</mosaic_0001>

<llo_original>
// kernel: tpu_custom_call.1
$region0: #{tpu_custom_call.1}
  #allocation0 [shape = 'u32[]', space=smem, size = 0x4, offset = 0x4, fixed_abs, tag = 'smem constant byte address 0x4 - core index']
  #allocation1 [shape = 'u32[144,128]{1,0:T(1,128)}', space=vmem, size = 0x12000, scoped, tag = 'internal scratch']
  #allocation2 [shape = 'f32[128,256]{1,0:T(8,128)}', space=vmem, size = 0x20000, scoped, tag = 'scratch operand']
  %s0 = inlined_call_operand.vmem [shape: f32[2,8,256], index: 0, kind: input, shape index: {}]
  %s1 = inlined_call_operand.vmem [shape: f32[384,8], index: 1, kind: input, shape index: {}]
  %s2 = inlined_call_operand.vmem [shape: f32[8,128], index: 2, kind: input, shape index: {}]
  %s3 = inlined_call_operand.vmem [shape: f32[8,1], index: 3, kind: input, shape index: {}]
  %s4 = inlined_call_operand.hbm [shape: f32[2,8,256], index: 4, kind: output, shape index: {}]
  %s5 = sld [smem:[#allocation0]]
  $region49: #{tpu_custom_call.1} parent=0
    _
  %s7 = ssub.s32 1, %s5
  %s8 = scalar_select 0, %s7, %s5
  $region1: #{tpu_custom_call.1} parent=0
    #allocation3 [shape = 'u8[16384]{0}', space=vmem, size = 0x4000, scoped, tag = 'output window, operand 0']
    #allocation4 [shape = 's32[2]{0}', space=sflag, size = 0x8, scoped, tag = 'scoped memory for tpu_custom_call.1']
    %9 = vsyncpa [#allocation4], 0
    %s10 = scalar_lea.sflag [#allocation4], 1
    %11 = vsyncpa %s10, 0
    loop: start=0, step=1, limit=4
    $region2: #{tpu_custom_call.1} parent=1 // loop_pre_header
      _
    $region3: #{tpu_custom_call.1} parent=1 // loop_header
      %s13 = sphi 0, %s17
      %p14 = scmp.ge.s32.totalorder %s13, 4
      %s23 = sphi 0, %s25
      %s26 = sphi 0, %s23
      %s27 = sphi 0, %s26
      %s43 = sphi 0, %s27
      %s47 = sphi 0, %s47
      %s49 = sphi 0, %s47
      %s50 = sphi 0, %s49
      %s64 = sphi 0, %s50
      %s68 = sphi 0, %s68
      %s70 = sphi 0, %s68
      %s71 = sphi 0, %s70
      %s85 = sphi 0, %s71
      %s89 = sphi 0, %s89
      %s91 = sphi 0, %s89
      %s92 = sphi 0, %s91
      %s106 = sphi 0, %s92
      %s112 = sphi 0, %s114
      %s115 = sphi 0, %s112
      %s116 = sphi 0, %s115
      %s132 = sphi 0, %s116
    $region4: #{tpu_custom_call.1} parent=1 // loop_header_branch
      %16 = sbr.rel (%p14) target = $region8
    $region5: #{tpu_custom_call.1} parent=1 // loop_body
      %s18 = ssub.s32 %s13, 1
      %s19 = ssub.s32 %s13, 2
      %s20 = sadd.s32 %s13, 1
      %s21 = ssub.s32 %s13, %s20
      %p22 = scmp.eq.s32.totalorder %s21, 0
      %s24 = sadd.s32 %s23, 1
      %s25 = scalar_select %p22, %s23, %s24
      %p28 = pneg %p22
      %p29 = scmp.eq.s32.totalorder %s13, 1
      %p30 = por %p28, %p29
      %p31 = scmp.ne.s32.totalorder %s23, %s26
      %p32 = scmp.eq.s32.totalorder %s13, 0
      %p33 = por %p31, %p32
      %p34 = scmp.ne.s32.totalorder %s23, %s26
      %p35 = scmp.eq.s32.totalorder %s18, 1
      %p36 = por %p34, %p35
      %p37 = scmp.ne.s32.totalorder %s26, %s27
      %p38 = scmp.eq.s32.totalorder %s18, 0
      %p39 = por %p37, %p38
      %p40 = scmp.ne.s32.totalorder %s26, %s27
      %p41 = scmp.eq.s32.totalorder %s19, 1
      %p42 = por %p40, %p41
      %p44 = scmp.ne.s32.totalorder %s27, %s43
      %p45 = scmp.eq.s32.totalorder %s19, 0
      %p46 = por %p44, %p45
      %s48 = sadd.s32 %s47, 1
      %p51 = scmp.eq.s32.totalorder %s13, 1
      %p52 = scmp.ne.s32.totalorder %s47, %s49
      %p53 = scmp.eq.s32.totalorder %s13, 0
      %p54 = por %p52, %p53
      %p55 = scmp.ne.s32.totalorder %s47, %s49
      %p56 = scmp.eq.s32.totalorder %s18, 1
      %p57 = por %p55, %p56
      %p58 = scmp.ne.s32.totalorder %s49, %s50
      %p59 = scmp.eq.s32.totalorder %s18, 0
      %p60 = por %p58, %p59
      %p61 = scmp.ne.s32.totalorder %s49, %s50
      %p62 = scmp.eq.s32.totalorder %s19, 1
      %p63 = por %p61, %p62
      %p65 = scmp.ne.s32.totalorder %s50, %s64
      %p66 = scmp.eq.s32.totalorder %s19, 0
      %p67 = por %p65, %p66
      %s69 = sadd.s32 %s68, 1
      %p72 = scmp.eq.s32.totalorder %s13, 1
      %p73 = scmp.ne.s32.totalorder %s68, %s70
      %p74 = scmp.eq.s32.totalorder %s13, 0
      %p75 = por %p73, %p74
      %p76 = scmp.ne.s32.totalorder %s68, %s70
      %p77 = scmp.eq.s32.totalorder %s18, 1
      %p78 = por %p76, %p77
      %p79 = scmp.ne.s32.totalorder %s70, %s71
      %p80 = scmp.eq.s32.totalorder %s18, 0
      %p81 = por %p79, %p80
      %p82 = scmp.ne.s32.totalorder %s70, %s71
      %p83 = scmp.eq.s32.totalorder %s19, 1
      %p84 = por %p82, %p83
      %p86 = scmp.ne.s32.totalorder %s71, %s85
      %p87 = scmp.eq.s32.totalorder %s19, 0
      %p88 = por %p86, %p87
      %s90 = sadd.s32 %s89, 1
      %p93 = scmp.eq.s32.totalorder %s13, 1
      %p94 = scmp.ne.s32.totalorder %s89, %s91
      %p95 = scmp.eq.s32.totalorder %s13, 0
      %p96 = por %p94, %p95
      %p97 = scmp.ne.s32.totalorder %s89, %s91
      %p98 = scmp.eq.s32.totalorder %s18, 1
      %p99 = por %p97, %p98
      %p100 = scmp.ne.s32.totalorder %s91, %s92
      %p101 = scmp.eq.s32.totalorder %s18, 0
      %p102 = por %p100, %p101
      %p103 = scmp.ne.s32.totalorder %s91, %s92
      %p104 = scmp.eq.s32.totalorder %s19, 1
      %p105 = por %p103, %p104
      %p107 = scmp.ne.s32.totalorder %s92, %s106
      %p108 = scmp.eq.s32.totalorder %s19, 0
      %p109 = por %p107, %p108
      %s110 = ssub.s32 %s13, %s20
      %p111 = scmp.eq.s32.totalorder %s110, 0
      %s113 = sadd.s32 %s112, 1
      %s114 = scalar_select %p111, %s112, %s113
      %p117 = pneg %p111
      %p118 = scmp.eq.s32.totalorder %s13, 1
      %p119 = por %p117, %p118
      %p120 = scmp.ne.s32.totalorder %s112, %s115
      %p121 = scmp.eq.s32.totalorder %s13, 0
      %p122 = por %p120, %p121
      %p123 = scmp.ne.s32.totalorder %s112, %s115
      %p124 = scmp.eq.s32.totalorder %s18, 1
      %p125 = por %p123, %p124
      %p126 = scmp.ne.s32.totalorder %s115, %s116
      %p127 = scmp.eq.s32.totalorder %s18, 0
      %p128 = por %p126, %p127
      %p129 = scmp.ne.s32.totalorder %s115, %s116
      %p130 = scmp.eq.s32.totalorder %s19, 1
      %p131 = por %p129, %p130
      %p133 = scmp.ne.s32.totalorder %s116, %s132
      %p134 = scmp.eq.s32.totalorder %s19, 0
      %p135 = por %p133, %p134
      %p136 = scmp.le.s32.totalorder 1, %s13
      %p137 = scmp.lt.s32.totalorder %s13, 3
      %p138 = pnand %p136, %p137
      %p139 = pneg %p138
      // Predicated region
      $region9: #{tpu_custom_call.1} parent=5 // pred_check
        _
      $region10: #{tpu_custom_call.1} parent=5 // pred_check_branch
        %141 = sbr.rel (%p138) target = $region12
      $region11: #{tpu_custom_call.1} parent=5 // pred_region
        %s142 = ssub.s32 %s13, 1
        // Predicated region
        $region13: #{tpu_custom_call.1} parent=11 // pred_check
          %p143 = pneg %p60
        $region14: #{tpu_custom_call.1} parent=11 // pred_check_branch
          %145 = sbr.rel (%p143) target = $region16
        $region15: #{tpu_custom_call.1} parent=11 // pred_region
          _
        $region16: #{tpu_custom_call.1} parent=11 // pred_fallthru
          _
        // Predicated region
        $region17: #{tpu_custom_call.1} parent=11 // pred_check
          %p146 = pneg %p81
        $region18: #{tpu_custom_call.1} parent=11 // pred_check_branch
          %148 = sbr.rel (%p146) target = $region20
        $region19: #{tpu_custom_call.1} parent=11 // pred_region
          _
        $region20: #{tpu_custom_call.1} parent=11 // pred_fallthru
          _
        // Predicated region
        $region21: #{tpu_custom_call.1} parent=11 // pred_check
          %p149 = pneg %p102
        $region22: #{tpu_custom_call.1} parent=11 // pred_check_branch
          %151 = sbr.rel (%p149) target = $region24
        $region23: #{tpu_custom_call.1} parent=11 // pred_region
          _
        $region24: #{tpu_custom_call.1} parent=11 // pred_fallthru
          _
      $region12: #{tpu_custom_call.1} parent=5 // pred_fallthru
        _
      %p152 = scmp.lt.s32.totalorder %s13, 2
      // Predicated region
      $region25: #{tpu_custom_call.1} parent=5 // pred_check
        %p153 = pneg %p152
      $region26: #{tpu_custom_call.1} parent=5 // pred_check_branch
        %155 = sbr.rel (%p153) target = $region28
      $region27: #{tpu_custom_call.1} parent=5 // pred_region
        // Predicated region
        $region29: #{tpu_custom_call.1} parent=27 // pred_check
          %p156 = pneg %p33
        $region30: #{tpu_custom_call.1} parent=27 // pred_check_branch
          %158 = sbr.rel (%p156) target = $region32
        $region31: #{tpu_custom_call.1} parent=27 // pred_region
          %p159 = scmp.lt.s32.totalorder %s13, 1
          %s160 = scalar_select %p159, %s13, 1
          %s161 = smul.addr %s160, 2
          %s162 = smul.addr %s161, 8
          %s163 = scalar_lea.vmem %s0, %s162
        $region32: #{tpu_custom_call.1} parent=27 // pred_fallthru
          _
      $region28: #{tpu_custom_call.1} parent=5 // pred_fallthru
        _
      %p164 = scmp.le.s32.totalorder 1, %s13
      %p165 = scmp.lt.s32.totalorder %s13, 3
      %p166 = pnand %p164, %p165
      %p167 = pneg %p166
      // Predicated region
      $region33: #{tpu_custom_call.1} parent=5 // pred_check
        _
      $region34: #{tpu_custom_call.1} parent=5 // pred_check_branch
        %169 = sbr.rel (%p166) target = $region36
      $region35: #{tpu_custom_call.1} parent=5 // pred_region
        %s170 = ssub.s32 %s13, 1
        %p171 = scmp.lt.s32.totalorder %s18, 1
        %s172 = scalar_select %p171, %s18, 1
        %s173 = smul.addr %s172, 2
        %s174 = smul.addr %s173, 8
        %s175 = scalar_lea.vmem %s0, %s174
        %p176 = pneg %p39
        %p177 = pneg %p36
        %p178 = pneg %p60
        %p179 = pneg %p57
        %p180 = pneg %p81
        %p181 = pneg %p78
        %p182 = pneg %p102
        %p183 = pneg %p99
        %p184 = pneg %p128
        %p185 = pneg %p125
        %s186 = sand.u32 %s115, 1
        %s187 = scalar_lea.sflag [#allocation4], %s186
        %s188 = sand.u32 %s115, 1
        %s189 = smul.addr %s188, 16
        %s190 = scalar_lea.vmem [#allocation3], %s189
        %p191 = scmp.lt.s32.totalorder %s18, 1
        %s192 = scalar_select %p191, %s18, 1
        %s193 = smul.addr %s192, 2
        %s194 = smul.addr %s193, 8
        %s195 = scalar_lea.vmem %s0, %s194
        %v196 = vld [vmem:[%s195] sm:$0xff]
        %v197 = vld [vmem:[%s195 + $0x8] sm:$0xff]
        %v198 = vld [vmem:[%s1] sm:$0xff]
        %v199 = vld [vmem:[%s1 + $0x8] sm:$0xff]
        %v200 = vld [vmem:[%s1 + $0x10] sm:$0xff]
        %v201 = vld [vmem:[%s1 + $0x18] sm:$0xff]
        %v202 = vld [vmem:[%s1 + $0x20] sm:$0xff]
        %v203 = vld [vmem:[%s1 + $0x28] sm:$0xff]
        %v204 = vld [vmem:[%s1 + $0x30] sm:$0xff]
        %v205 = vld [vmem:[%s1 + $0x38] sm:$0xff]
        %v206 = vld [vmem:[%s1 + $0x40] sm:$0xff]
        %v207 = vld [vmem:[%s1 + $0x48] sm:$0xff]
        %v208 = vld [vmem:[%s1 + $0x50] sm:$0xff]
        %v209 = vld [vmem:[%s1 + $0x58] sm:$0xff]
        %v210 = vld [vmem:[%s1 + $0x60] sm:$0xff]
        %v211 = vld [vmem:[%s1 + $0x68] sm:$0xff]
        %v212 = vld [vmem:[%s1 + $0x70] sm:$0xff]
        %v213 = vld [vmem:[%s1 + $0x78] sm:$0xff]
        %v214 = vld [vmem:[%s1 + $0x80] sm:$0xff]
        %v215 = vld [vmem:[%s1 + $0x88] sm:$0xff]
        %v216 = vld [vmem:[%s1 + $0x90] sm:$0xff]
        %v217 = vld [vmem:[%s1 + $0x98] sm:$0xff]
        %v218 = vld [vmem:[%s1 + $0xa0] sm:$0xff]
        %v219 = vld [vmem:[%s1 + $0xa8] sm:$0xff]
        %v220 = vld [vmem:[%s1 + $0xb0] sm:$0xff]
        %v221 = vld [vmem:[%s1 + $0xb8] sm:$0xff]
        %v222 = vld [vmem:[%s1 + $0xc0] sm:$0xff]
        %v223 = vld [vmem:[%s1 + $0xc8] sm:$0xff]
        %v224 = vld [vmem:[%s1 + $0xd0] sm:$0xff]
        %v225 = vld [vmem:[%s1 + $0xd8] sm:$0xff]
        %v226 = vld [vmem:[%s1 + $0xe0] sm:$0xff]
        %v227 = vld [vmem:[%s1 + $0xe8] sm:$0xff]
        %v228 = vld [vmem:[%s1 + $0xf0] sm:$0xff]
        %v229 = vld [vmem:[%s1 + $0xf8] sm:$0xff]
        %v230 = vld [vmem:[%s1 + $0x100] sm:$0xff]
        %v231 = vld [vmem:[%s1 + $0x108] sm:$0xff]
        %v232 = vld [vmem:[%s1 + $0x110] sm:$0xff]
        %v233 = vld [vmem:[%s1 + $0x118] sm:$0xff]
        %v234 = vld [vmem:[%s1 + $0x120] sm:$0xff]
        %v235 = vld [vmem:[%s1 + $0x128] sm:$0xff]
        %v236 = vld [vmem:[%s1 + $0x130] sm:$0xff]
        %v237 = vld [vmem:[%s1 + $0x138] sm:$0xff]
        %v238 = vld [vmem:[%s1 + $0x140] sm:$0xff]
        %v239 = vld [vmem:[%s1 + $0x148] sm:$0xff]
        %v240 = vld [vmem:[%s1 + $0x150] sm:$0xff]
        %v241 = vld [vmem:[%s1 + $0x158] sm:$0xff]
        %v242 = vld [vmem:[%s1 + $0x160] sm:$0xff]
        %v243 = vld [vmem:[%s1 + $0x168] sm:$0xff]
        %v244 = vld [vmem:[%s1 + $0x170] sm:$0xff]
        %v245 = vld [vmem:[%s1 + $0x178] sm:$0xff]
        %vm246 = vcmask 64512
        %v248 = vsel %vm246, %v198, 0
        %v251 = vsel %vm246, %v199, 0
        %v254 = vsel %vm246, %v200, 0
        %v257 = vsel %vm246, %v201, 0
        %v260 = vsel %vm246, %v202, 0
        %v263 = vsel %vm246, %v203, 0
        %v266 = vsel %vm246, %v204, 0
        %v269 = vsel %vm246, %v205, 0
        %v272 = vsel %vm246, %v206, 0
        %v275 = vsel %vm246, %v207, 0
        %v278 = vsel %vm246, %v208, 0
        %v281 = vsel %vm246, %v209, 0
        %v284 = vsel %vm246, %v210, 0
        %v287 = vsel %vm246, %v211, 0
        %v290 = vsel %vm246, %v212, 0
        %v293 = vsel %vm246, %v213, 0
        %v296 = vsel %vm246, %v214, 0
        %v299 = vsel %vm246, %v215, 0
        %v302 = vsel %vm246, %v216, 0
        %v305 = vsel %vm246, %v217, 0
        %v308 = vsel %vm246, %v218, 0
        %v311 = vsel %vm246, %v219, 0
        %v314 = vsel %vm246, %v220, 0
        %v317 = vsel %vm246, %v221, 0
        %v320 = vsel %vm246, %v222, 0
        %v323 = vsel %vm246, %v223, 0
        %v326 = vsel %vm246, %v224, 0
        %v329 = vsel %vm246, %v225, 0
        %v332 = vsel %vm246, %v226, 0
        %v335 = vsel %vm246, %v227, 0
        %v338 = vsel %vm246, %v228, 0
        %v341 = vsel %vm246, %v229, 0
        %v344 = vsel %vm246, %v230, 0
        %v347 = vsel %vm246, %v231, 0
        %v350 = vsel %vm246, %v232, 0
        %v353 = vsel %vm246, %v233, 0
        %v356 = vsel %vm246, %v234, 0
        %v359 = vsel %vm246, %v235, 0
        %v362 = vsel %vm246, %v236, 0
        %v365 = vsel %vm246, %v237, 0
        %v368 = vsel %vm246, %v238, 0
        %v371 = vsel %vm246, %v239, 0
        %v374 = vsel %vm246, %v240, 0
        %v377 = vsel %vm246, %v241, 0
        %v380 = vsel %vm246, %v242, 0
        %v383 = vsel %vm246, %v243, 0
        %v386 = vsel %vm246, %v244, 0
        %v389 = vsel %vm246, %v245, 0
        %391 = vmatprep.subr.mxu0 %v197
        %392 = vmatpush1.msra.mxu0 %v196
        %393 = vmatprep.subr.mxu0 0.0
        %394 = vmatpush1.msra.mxu0 0.0
        %395 = vmatprep.subr.mxu0 0.0
        %396 = vmatpush1.msra.mxu0 0.0
        %397 = vmatprep.subr.mxu0 0.0
        %398 = vmatpush1.msra.mxu0 0.0
        %399 = vmatprep.subr.mxu0 0.0
        %400 = vmatpush1.msra.mxu0 0.0
        %401 = vmatprep.subr.mxu0 0.0
        %402 = vmatpush1.msra.mxu0 0.0
        %403 = vmatprep.subr.mxu0 0.0
        %404 = vmatpush1.msra.mxu0 0.0
        %405 = vmatprep.subr.mxu0 0.0
        %406 = vmatpush1.msra.mxu0 0.0
        %407 = vmatprep.subr.mxu0 0.0
        %408 = vmatpush1.msra.mxu0 0.0
        %409 = vmatprep.subr.mxu0 0.0
        %410 = vmatpush1.msra.mxu0 0.0
        %411 = vmatprep.subr.mxu0 0.0
        %412 = vmatpush1.msra.mxu0 0.0
        %413 = vmatprep.subr.mxu0 0.0
        %414 = vmatpush1.msra.mxu0 0.0
        %415 = vmatprep.subr.mxu0 0.0
        %416 = vmatpush1.msra.mxu0 0.0
        %417 = vmatprep.subr.mxu0 0.0
        %418 = vmatpush1.msra.mxu0 0.0
        %419 = vmatprep.subr.mxu0 0.0
        %420 = vmatpush1.msra.mxu0 0.0
        %421 = vmatprep.subr.mxu0 0.0
        %422 = vmatpush1.msra.mxu0 0.0
        %423 = vmatprep.subr.mxu0 0.0
        %424 = vmatpush1.msra.mxu0 0.0
        %425 = vmatprep.subr.mxu0 0.0
        %426 = vmatpush1.msra.mxu0 0.0
        %427 = vmatprep.subr.mxu0 0.0
        %428 = vmatpush1.msra.mxu0 0.0
        %429 = vmatprep.subr.mxu0 0.0
        %430 = vmatpush1.msra.mxu0 0.0
        %431 = vmatprep.subr.mxu0 0.0
        %432 = vmatpush1.msra.mxu0 0.0
        %433 = vmatprep.subr.mxu0 0.0
        %434 = vmatpush1.msra.mxu0 0.0
        %435 = vmatprep.subr.mxu0 0.0
        %436 = vmatpush1.msra.mxu0 0.0
        %437 = vmatprep.subr.mxu0 0.0
        %438 = vmatpush1.msra.mxu0 0.0
        %439 = vmatprep.subr.mxu0 0.0
        %440 = vmatpush1.msra.mxu0 0.0
        %441 = vmatprep.subr.mxu0 0.0
        %442 = vmatpush1.msra.mxu0 0.0
        %443 = vmatprep.subr.mxu0 0.0
        %444 = vmatpush1.msra.mxu0 0.0
        %445 = vmatprep.subr.mxu0 0.0
        %446 = vmatpush1.msra.mxu0 0.0
        %447 = vmatprep.subr.mxu0 0.0
        %448 = vmatpush1.msra.mxu0 0.0
        %449 = vmatprep.subr.mxu0 0.0
        %450 = vmatpush1.msra.mxu0 0.0
        %451 = vmatprep.subr.mxu0 0.0
        %452 = vmatpush1.msra.mxu0 0.0
        %453 = vmatprep.subr.mxu0 0.0
        %454 = vmatpush1.msra.mxu0 0.0
        %455 = vmatprep.mubr.f32.mxu0 0.0
        %456 = vmatmul.mubr.f32.gmra.mrb[0].mxu0 %v248
        %v457 = vpop.f32.mrb[0].mxu0
        %v458 = vadd.f32 0.0, %v457
        %v459 = vpop.f32.mrb[0].mxu0
        %v460 = vadd.f32 0.0, %v459
        %461 = vmatprep.mubr.f32.mxu0 0.0
        %462 = vmatmul.mubr.f32.gmra.mrb[0].mxu0 %v251
        %v463 = vpop.f32.mrb[0].mxu0
        %v464 = vadd.f32 0.0, %v463
        %v465 = vpop.f32.mrb[0].mxu0
        %v466 = vadd.f32 0.0, %v465
        %467 = vmatprep.mubr.f32.mxu0 0.0
        %468 = vmatmul.mubr.f32.gmra.mrb[0].mxu0 %v254
        %v469 = vpop.f32.mrb[0].mxu0
        %v470 = vadd.f32 0.0, %v469
        %v471 = vpop.f32.mrb[0].mxu0
        %v472 = vadd.f32 0.0, %v471
        %473 = vmatprep.mubr.f32.mxu0 0.0
        %474 = vmatmul.mubr.f32.gmra.mrb[0].mxu0 %v257
        %v475 = vpop.f32.mrb[0].mxu0
        %v476 = vadd.f32 0.0, %v475
        %v477 = vpop.f32.mrb[0].mxu0
        %v478 = vadd.f32 0.0, %v477
        %479 = vmatprep.mubr.f32.mxu0 0.0
        %480 = vmatmul.mubr.f32.gmra.mrb[0].mxu0 %v260
        %v481 = vpop.f32.mrb[0].mxu0
        %v482 = vadd.f32 0.0, %v481
        %v483 = vpop.f32.mrb[0].mxu0
        %v484 = vadd.f32 0.0, %v483
        %485 = vmatprep.mubr.f32.mxu0 0.0
        %486 = vmatmul.mubr.f32.gmra.mrb[0].mxu0 %v263
        %v487 = vpop.f32.mrb[0].mxu0
        %v488 = vadd.f32 0.0, %v487
        %v489 = vpop.f32.mrb[0].mxu0
        %v490 = vadd.f32 0.0, %v489
        %491 = vmatprep.mubr.f32.mxu0 0.0
        %492 = vmatmul.mubr.f32.gmra.mrb[0].mxu0 %v266
        %v493 = vpop.f32.mrb[0].mxu0
        %v494 = vadd.f32 0.0, %v493
        %v495 = vpop.f32.mrb[0].mxu0
        %v496 = vadd.f32 0.0, %v495
        %497 = vmatprep.mubr.f32.mxu0 0.0
        %498 = vmatmul.mubr.f32.gmra.mrb[0].mxu0 %v269
        %v499 = vpop.f32.mrb[0].mxu0
        %v500 = vadd.f32 0.0, %v499
        %v501 = vpop.f32.mrb[0].mxu0
        %v502 = vadd.f32 0.0, %v501
        %503 = vmatprep.mubr.f32.mxu0 0.0
        %504 = vmatmul.mubr.f32.gmra.mrb[0].mxu0 %v272
        %v505 = vpop.f32.mrb[0].mxu0
        %v506 = vadd.f32 0.0, %v505
        %v507 = vpop.f32.mrb[0].mxu0
        %v508 = vadd.f32 0.0, %v507
        %509 = vmatprep.mubr.f32.mxu0 0.0
        %510 = vmatmul.mubr.f32.gmra.mrb[0].mxu0 %v275
        %v511 = vpop.f32.mrb[0].mxu0
        %v512 = vadd.f32 0.0, %v511
        %v513 = vpop.f32.mrb[0].mxu0
        %v514 = vadd.f32 0.0, %v513
        %515 = vmatprep.mubr.f32.mxu0 0.0
        %516 = vmatmul.mubr.f32.gmra.mrb[0].mxu0 %v278
        %v517 = vpop.f32.mrb[0].mxu0
        %v518 = vadd.f32 0.0, %v517
        %v519 = vpop.f32.mrb[0].mxu0
        %v520 = vadd.f32 0.0, %v519
        %521 = vmatprep.mubr.f32.mxu0 0.0
        %522 = vmatmul.mubr.f32.gmra.mrb[0].mxu0 %v281
        %v523 = vpop.f32.mrb[0].mxu0
        %v524 = vadd.f32 0.0, %v523
        %v525 = vpop.f32.mrb[0].mxu0
        %v526 = vadd.f32 0.0, %v525
        %527 = vmatprep.mubr.f32.mxu0 0.0
        %528 = vmatmul.mubr.f32.gmra.mrb[0].mxu0 %v284
        %v529 = vpop.f32.mrb[0].mxu0
        %v530 = vadd.f32 0.0, %v529
        %v531 = vpop.f32.mrb[0].mxu0
        %v532 = vadd.f32 0.0, %v531
        %533 = vmatprep.mubr.f32.mxu0 0.0
        %534 = vmatmul.mubr.f32.gmra.mrb[0].mxu0 %v287
        %v535 = vpop.f32.mrb[0].mxu0
        %v536 = vadd.f32 0.0, %v535
        %v537 = vpop.f32.mrb[0].mxu0
        %v538 = vadd.f32 0.0, %v537
        %539 = vmatprep.mubr.f32.mxu0 0.0
        %540 = vmatmul.mubr.f32.gmra.mrb[0].mxu0 %v290
        %v541 = vpop.f32.mrb[0].mxu0
        %v542 = vadd.f32 0.0, %v541
        %v543 = vpop.f32.mrb[0].mxu0
        %v544 = vadd.f32 0.0, %v543
        %545 = vmatprep.mubr.f32.mxu0 0.0
        %546 = vmatmul.mubr.f32.gmra.mrb[0].mxu0 %v293
        %v547 = vpop.f32.mrb[0].mxu0
        %v548 = vadd.f32 0.0, %v547
        %v549 = vpop.f32.mrb[0].mxu0
        %v550 = vadd.f32 0.0, %v549
        %551 = vmatprep.mubr.f32.mxu0 0.0
        %552 = vmatmul.mubr.f32.gmra.mrb[0].mxu0 %v296
        %v553 = vpop.f32.mrb[0].mxu0
        %v554 = vadd.f32 0.0, %v553
        %v555 = vpop.f32.mrb[0].mxu0
        %v556 = vadd.f32 0.0, %v555
        %557 = vmatprep.mubr.f32.mxu0 0.0
        %558 = vmatmul.mubr.f32.gmra.mrb[0].mxu0 %v299
        %v559 = vpop.f32.mrb[0].mxu0
        %v560 = vadd.f32 0.0, %v559
        %v561 = vpop.f32.mrb[0].mxu0
        %v562 = vadd.f32 0.0, %v561
        %563 = vmatprep.mubr.f32.mxu0 0.0
        %564 = vmatmul.mubr.f32.gmra.mrb[0].mxu0 %v302
        %v565 = vpop.f32.mrb[0].mxu0
        %v566 = vadd.f32 0.0, %v565
        %v567 = vpop.f32.mrb[0].mxu0
        %v568 = vadd.f32 0.0, %v567
        %569 = vmatprep.mubr.f32.mxu0 0.0
        %570 = vmatmul.mubr.f32.gmra.mrb[0].mxu0 %v305
        %v571 = vpop.f32.mrb[0].mxu0
        %v572 = vadd.f32 0.0, %v571
        %v573 = vpop.f32.mrb[0].mxu0
        %v574 = vadd.f32 0.0, %v573
        %575 = vmatprep.mubr.f32.mxu0 0.0
        %576 = vmatmul.mubr.f32.gmra.mrb[0].mxu0 %v308
        %v577 = vpop.f32.mrb[0].mxu0
        %v578 = vadd.f32 0.0, %v577
        %v579 = vpop.f32.mrb[0].mxu0
        %v580 = vadd.f32 0.0, %v579
        %581 = vmatprep.mubr.f32.mxu0 0.0
        %582 = vmatmul.mubr.f32.gmra.mrb[0].mxu0 %v311
        %v583 = vpop.f32.mrb[0].mxu0
        %v584 = vadd.f32 0.0, %v583
        %v585 = vpop.f32.mrb[0].mxu0
        %v586 = vadd.f32 0.0, %v585
        %587 = vmatprep.mubr.f32.mxu0 0.0
        %588 = vmatmul.mubr.f32.gmra.mrb[0].mxu0 %v314
        %v589 = vpop.f32.mrb[0].mxu0
        %v590 = vadd.f32 0.0, %v589
        %v591 = vpop.f32.mrb[0].mxu0
        %v592 = vadd.f32 0.0, %v591
        %593 = vmatprep.mubr.f32.mxu0 0.0
        %594 = vmatmul.mubr.f32.gmra.mrb[0].mxu0 %v317
        %v595 = vpop.f32.mrb[0].mxu0
        %v596 = vadd.f32 0.0, %v595
        %v597 = vpop.f32.mrb[0].mxu0
        %v598 = vadd.f32 0.0, %v597
        %599 = vmatprep.mubr.f32.mxu0 0.0
        %600 = vmatmul.mubr.f32.gmra.mrb[0].mxu0 %v320
        %v601 = vpop.f32.mrb[0].mxu0
        %v602 = vadd.f32 0.0, %v601
        %v603 = vpop.f32.mrb[0].mxu0
        %v604 = vadd.f32 0.0, %v603
        %605 = vmatprep.mubr.f32.mxu0 0.0
        %606 = vmatmul.mubr.f32.gmra.mrb[0].mxu0 %v323
        %v607 = vpop.f32.mrb[0].mxu0
        %v608 = vadd.f32 0.0, %v607
        %v609 = vpop.f32.mrb[0].mxu0
        %v610 = vadd.f32 0.0, %v609
        %611 = vmatprep.mubr.f32.mxu0 0.0
        %612 = vmatmul.mubr.f32.gmra.mrb[0].mxu0 %v326
        %v613 = vpop.f32.mrb[0].mxu0
        %v614 = vadd.f32 0.0, %v613
        %v615 = vpop.f32.mrb[0].mxu0
        %v616 = vadd.f32 0.0, %v615
        %617 = vmatprep.mubr.f32.mxu0 0.0
        %618 = vmatmul.mubr.f32.gmra.mrb[0].mxu0 %v329
        %v619 = vpop.f32.mrb[0].mxu0
        %v620 = vadd.f32 0.0, %v619
        %v621 = vpop.f32.mrb[0].mxu0
        %v622 = vadd.f32 0.0, %v621
        %623 = vmatprep.mubr.f32.mxu0 0.0
        %624 = vmatmul.mubr.f32.gmra.mrb[0].mxu0 %v332
        %v625 = vpop.f32.mrb[0].mxu0
        %v626 = vadd.f32 0.0, %v625
        %v627 = vpop.f32.mrb[0].mxu0
        %v628 = vadd.f32 0.0, %v627
        %629 = vmatprep.mubr.f32.mxu0 0.0
        %630 = vmatmul.mubr.f32.gmra.mrb[0].mxu0 %v335
        %v631 = vpop.f32.mrb[0].mxu0
        %v632 = vadd.f32 0.0, %v631
        %v633 = vpop.f32.mrb[0].mxu0
        %v634 = vadd.f32 0.0, %v633
        %635 = vmatprep.mubr.f32.mxu0 0.0
        %636 = vmatmul.mubr.f32.gmra.mrb[0].mxu0 %v338
        %v637 = vpop.f32.mrb[0].mxu0
        %v638 = vadd.f32 0.0, %v637
        %v639 = vpop.f32.mrb[0].mxu0
        %v640 = vadd.f32 0.0, %v639
        %641 = vmatprep.mubr.f32.mxu0 0.0
        %642 = vmatmul.mubr.f32.gmra.mrb[0].mxu0 %v341
        %v643 = vpop.f32.mrb[0].mxu0
        %v644 = vadd.f32 0.0, %v643
        %v645 = vpop.f32.mrb[0].mxu0
        %v646 = vadd.f32 0.0, %v645
        %647 = vmatprep.mubr.f32.mxu0 0.0
        %648 = vmatmul.mubr.f32.gmra.mrb[0].mxu0 %v344
        %v649 = vpop.f32.mrb[0].mxu0
        %v650 = vadd.f32 0.0, %v649
        %v651 = vpop.f32.mrb[0].mxu0
        %v652 = vadd.f32 0.0, %v651
        %653 = vmatprep.mubr.f32.mxu0 0.0
        %654 = vmatmul.mubr.f32.gmra.mrb[0].mxu0 %v347
        %v655 = vpop.f32.mrb[0].mxu0
        %v656 = vadd.f32 0.0, %v655
        %v657 = vpop.f32.mrb[0].mxu0
        %v658 = vadd.f32 0.0, %v657
        %659 = vmatprep.mubr.f32.mxu0 0.0
        %660 = vmatmul.mubr.f32.gmra.mrb[0].mxu0 %v350
        %v661 = vpop.f32.mrb[0].mxu0
        %v662 = vadd.f32 0.0, %v661
        %v663 = vpop.f32.mrb[0].mxu0
        %v664 = vadd.f32 0.0, %v663
        %665 = vmatprep.mubr.f32.mxu0 0.0
        %666 = vmatmul.mubr.f32.gmra.mrb[0].mxu0 %v353
        %v667 = vpop.f32.mrb[0].mxu0
        %v668 = vadd.f32 0.0, %v667
        %v669 = vpop.f32.mrb[0].mxu0
        %v670 = vadd.f32 0.0, %v669
        %671 = vmatprep.mubr.f32.mxu0 0.0
        %672 = vmatmul.mubr.f32.gmra.mrb[0].mxu0 %v356
        %v673 = vpop.f32.mrb[0].mxu0
        %v674 = vadd.f32 0.0, %v673
        %v675 = vpop.f32.mrb[0].mxu0
        %v676 = vadd.f32 0.0, %v675
        %677 = vmatprep.mubr.f32.mxu0 0.0
        %678 = vmatmul.mubr.f32.gmra.mrb[0].mxu0 %v359
        %v679 = vpop.f32.mrb[0].mxu0
        %v680 = vadd.f32 0.0, %v679
        %v681 = vpop.f32.mrb[0].mxu0
        %v682 = vadd.f32 0.0, %v681
        %683 = vmatprep.mubr.f32.mxu0 0.0
        %684 = vmatmul.mubr.f32.gmra.mrb[0].mxu0 %v362
        %v685 = vpop.f32.mrb[0].mxu0
        %v686 = vadd.f32 0.0, %v685
        %v687 = vpop.f32.mrb[0].mxu0
        %v688 = vadd.f32 0.0, %v687
        %689 = vmatprep.mubr.f32.mxu0 0.0
        %690 = vmatmul.mubr.f32.gmra.mrb[0].mxu0 %v365
        %v691 = vpop.f32.mrb[0].mxu0
        %v692 = vadd.f32 0.0, %v691
        %v693 = vpop.f32.mrb[0].mxu0
        %v694 = vadd.f32 0.0, %v693
        %695 = vmatprep.mubr.f32.mxu0 0.0
        %696 = vmatmul.mubr.f32.gmra.mrb[0].mxu0 %v368
        %v697 = vpop.f32.mrb[0].mxu0
        %v698 = vadd.f32 0.0, %v697
        %v699 = vpop.f32.mrb[0].mxu0
        %v700 = vadd.f32 0.0, %v699
        %701 = vmatprep.mubr.f32.mxu0 0.0
        %702 = vmatmul.mubr.f32.gmra.mrb[0].mxu0 %v371
        %v703 = vpop.f32.mrb[0].mxu0
        %v704 = vadd.f32 0.0, %v703
        %v705 = vpop.f32.mrb[0].mxu0
        %v706 = vadd.f32 0.0, %v705
        %707 = vmatprep.mubr.f32.mxu0 0.0
        %708 = vmatmul.mubr.f32.gmra.mrb[0].mxu0 %v374
        %v709 = vpop.f32.mrb[0].mxu0
        %v710 = vadd.f32 0.0, %v709
        %v711 = vpop.f32.mrb[0].mxu0
        %v712 = vadd.f32 0.0, %v711
        %713 = vmatprep.mubr.f32.mxu0 0.0
        %714 = vmatmul.mubr.f32.gmra.mrb[0].mxu0 %v377
        %v715 = vpop.f32.mrb[0].mxu0
        %v716 = vadd.f32 0.0, %v715
        %v717 = vpop.f32.mrb[0].mxu0
        %v718 = vadd.f32 0.0, %v717
        %719 = vmatprep.mubr.f32.mxu0 0.0
        %720 = vmatmul.mubr.f32.gmra.mrb[0].mxu0 %v380
        %v721 = vpop.f32.mrb[0].mxu0
        %v722 = vadd.f32 0.0, %v721
        %v723 = vpop.f32.mrb[0].mxu0
        %v724 = vadd.f32 0.0, %v723
        %725 = vmatprep.mubr.f32.mxu0 0.0
        %726 = vmatmul.mubr.f32.gmra.mrb[0].mxu0 %v383
        %v727 = vpop.f32.mrb[0].mxu0
        %v728 = vadd.f32 0.0, %v727
        %v729 = vpop.f32.mrb[0].mxu0
        %v730 = vadd.f32 0.0, %v729
        %731 = vmatprep.mubr.f32.mxu0 0.0
        %732 = vmatmul.mubr.f32.gmra.mrb[0].mxu0 %v386
        %v733 = vpop.f32.mrb[0].mxu0
        %v734 = vadd.f32 0.0, %v733
        %v735 = vpop.f32.mrb[0].mxu0
        %v736 = vadd.f32 0.0, %v735
        %737 = vmatprep.mubr.f32.mxu0 0.0
        %738 = vmatmul.mubr.f32.gmra.mrb[0].mxu0 %v389
        %v739 = vpop.f32.mrb[0].mxu0
        %v740 = vadd.f32 0.0, %v739
        %v741 = vpop.f32.mrb[0].mxu0
        %v742 = vadd.f32 0.0, %v741
        %743 = vdwg.mxu0
        %v744 = vmax.f32 %v554, %v556
        %745 = vmax.xlane.f32.xlu0 %v744
        %v746 = vpop.xlane.xlu0 %745
        %v747 = vmax.f32 %v560, %v562
        %748 = vmax.xlane.f32.xlu0 %v747
        %v749 = vpop.xlane.xlu0 %748
        %v750 = vmax.f32 %v566, %v568
        %751 = vmax.xlane.f32.xlu0 %v750
        %v752 = vpop.xlane.xlu0 %751
        %v753 = vmax.f32 %v572, %v574
        %754 = vmax.xlane.f32.xlu0 %v753
        %v755 = vpop.xlane.xlu0 %754
        %v756 = vsub.f32 %v554, %v746
        %v757 = vsub.f32 %v556, %v746
        %v758 = vsub.f32 %v560, %v749
        %v759 = vsub.f32 %v562, %v749
        %v760 = vsub.f32 %v566, %v752
        %v761 = vsub.f32 %v568, %v752
        %v762 = vsub.f32 %v572, %v755
        %v763 = vsub.f32 %v574, %v755
        %v764 = vmul.f32 %v756, 1.442695
        %v765 = vpow.pop %v764
        %v766 = vmul.f32 %v757, 1.442695
        %v767 = vpow.pop %v766
        %v768 = vmul.f32 %v758, 1.442695
        %v769 = vpow.pop %v768
        %v770 = vmul.f32 %v759, 1.442695
        %v771 = vpow.pop %v770
        %v772 = vmul.f32 %v760, 1.442695
        %v773 = vpow.pop %v772
        %v774 = vmul.f32 %v761, 1.442695
        %v775 = vpow.pop %v774
        %v776 = vmul.f32 %v762, 1.442695
        %v777 = vpow.pop %v776
        %v778 = vmul.f32 %v763, 1.442695
        %v779 = vpow.pop %v778
        %v780 = vadd.f32 %v765, %v767
        %781 = vadd.xlane.f32.xlu0 %v780
        %v782 = vpop.xlane.xlu0 %781
        %v783 = vadd.f32 %v769, %v771
        %784 = vadd.xlane.f32.xlu0 %v783
        %v785 = vpop.xlane.xlu0 %784
        %v786 = vadd.f32 %v773, %v775
        %787 = vadd.xlane.f32.xlu0 %v786
        %v788 = vpop.xlane.xlu0 %787
        %v789 = vadd.f32 %v777, %v779
        %790 = vadd.xlane.f32.xlu0 %v789
        %v791 = vpop.xlane.xlu0 %790
        %792 = vmatprep.subr.mxu0 %v652
        %793 = vmatpush1.xpose.msra.mxu0 %v650
        %794 = vmatprep.subr.mxu0 %v658
        %795 = vmatpush1.xpose.msra.mxu0 %v656
        %796 = vmatprep.subr.mxu0 %v664
        %797 = vmatpush1.xpose.msra.mxu0 %v662
        %798 = vmatprep.subr.mxu0 %v670
        %799 = vmatpush1.xpose.msra.mxu0 %v668
        %800 = vmatprep.subr.mxu0 0.0
        %801 = vmatpush1.xpose.msra.mxu0 0.0
        %802 = vmatprep.subr.mxu0 0.0
        %803 = vmatpush1.xpose.msra.mxu0 0.0
        %804 = vmatprep.subr.mxu0 0.0
        %805 = vmatpush1.xpose.msra.mxu0 0.0
        %806 = vmatprep.subr.mxu0 0.0
        %807 = vmatpush1.xpose.msra.mxu0 0.0
        %808 = vmatprep.subr.mxu0 0.0
        %809 = vmatpush1.xpose.msra.mxu0 0.0
        %810 = vmatprep.subr.mxu0 0.0
        %811 = vmatpush1.xpose.msra.mxu0 0.0
        %812 = vmatprep.subr.mxu0 0.0
        %813 = vmatpush1.xpose.msra.mxu0 0.0
        %814 = vmatprep.subr.mxu0 0.0
        %815 = vmatpush1.xpose.msra.mxu0 0.0
        %816 = vmatprep.subr.mxu0 0.0
        %817 = vmatpush1.xpose.msra.mxu0 0.0
        %818 = vmatprep.subr.mxu0 0.0
        %819 = vmatpush1.xpose.msra.mxu0 0.0
        %820 = vmatprep.subr.mxu0 0.0
        %821 = vmatpush1.xpose.msra.mxu0 0.0
        %822 = vmatprep.subr.mxu0 0.0
        %823 = vmatpush1.xpose.msra.mxu0 0.0
        %824 = vmatprep.subr.mxu0 0.0
        %825 = vmatpush1.xpose.msra.mxu0 0.0
        %826 = vmatprep.subr.mxu0 0.0
        %827 = vmatpush1.xpose.msra.mxu0 0.0
        %828 = vmatprep.subr.mxu0 0.0
        %829 = vmatpush1.xpose.msra.mxu0 0.0
        %830 = vmatprep.subr.mxu0 0.0
        %831 = vmatpush1.xpose.msra.mxu0 0.0
        %832 = vmatprep.subr.mxu0 0.0
        %833 = vmatpush1.xpose.msra.mxu0 0.0
        %834 = vmatprep.subr.mxu0 0.0
        %835 = vmatpush1.xpose.msra.mxu0 0.0
        %836 = vmatprep.subr.mxu0 0.0
        %837 = vmatpush1.xpose.msra.mxu0 0.0
        %838 = vmatprep.subr.mxu0 0.0
        %839 = vmatpush1.xpose.msra.mxu0 0.0
        %840 = vmatprep.subr.mxu0 0.0
        %841 = vmatpush1.xpose.msra.mxu0 0.0
        %842 = vmatprep.subr.mxu0 0.0
        %843 = vmatpush1.xpose.msra.mxu0 0.0
        %844 = vmatprep.subr.mxu0 0.0
        %845 = vmatpush1.xpose.msra.mxu0 0.0
        %846 = vmatprep.subr.mxu0 0.0
        %847 = vmatpush1.xpose.msra.mxu0 0.0
        %848 = vmatprep.subr.mxu0 0.0
        %849 = vmatpush1.xpose.msra.mxu0 0.0
        %850 = vmatprep.subr.mxu0 0.0
        %851 = vmatpush1.xpose.msra.mxu0 0.0
        %852 = vmatprep.subr.mxu0 0.0
        %853 = vmatpush1.xpose.msra.mxu0 0.0
        %854 = vmatprep.subr.mxu0 0.0
        %855 = vmatpush1.xpose.msra.mxu0 0.0
        %856 = vmatprep.mubr.f32.mxu0 %v767
        %857 = vmatmul.mubr.f32.gmra.mrb[0].mxu0 %v765
        %v858 = vpop.f32.mrb[0].mxu0
        %v859 = vadd.f32 0.0, %v858
        %v860 = vpop.f32.mrb[0].mxu0
        %861 = vmatprep.mubr.f32.mxu0 %v771
        %862 = vmatmul.mubr.f32.gmra.mrb[0].mxu0 %v769
        %v863 = vpop.f32.mrb[0].mxu0
        %v864 = vadd.f32 0.0, %v863
        %v865 = vpop.f32.mrb[0].mxu0
        %866 = vmatprep.mubr.f32.mxu0 %v775
        %867 = vmatmul.mubr.f32.gmra.mrb[0].mxu0 %v773
        %v868 = vpop.f32.mrb[0].mxu0
        %v869 = vadd.f32 0.0, %v868
        %v870 = vpop.f32.mrb[0].mxu0
        %871 = vmatprep.mubr.f32.mxu0 %v779
        %872 = vmatmul.mubr.f32.gmra.mrb[0].mxu0 %v777
        %v873 = vpop.f32.mrb[0].mxu0
        %v874 = vadd.f32 0.0, %v873
        %v875 = vpop.f32.mrb[0].mxu0
        %876 = vdwg.mxu0
        %v877 = vrcp.pop %v782
        %v878 = vrcp.pop %v785
        %v879 = vrcp.pop %v788
        %v880 = vrcp.pop %v791
        %v881 = vmul.f32 %v859, %v877
        %v882 = vmul.f32 %v864, %v878
        %v883 = vmul.f32 %v869, %v879
        %v884 = vmul.f32 %v874, %v880
        %vm885 = vcmask 261120
        %v887 = vsel %vm885, %v881, 0
        %v890 = vsel %vm885, %v882, 0
        %v893 = vsel %vm885, %v883, 0
        %v896 = vsel %vm885, %v884, 0
        %898 = vmatprep.subr.mxu0 %v460
        %899 = vmatpush1.msra.mxu0 %v458
        %900 = vmatprep.subr.mxu0 %v466
        %901 = vmatpush1.msra.mxu0 %v464
        %902 = vmatprep.subr.mxu0 %v472
        %903 = vmatpush1.msra.mxu0 %v470
        %904 = vmatprep.subr.mxu0 %v478
        %905 = vmatpush1.msra.mxu0 %v476
        %906 = vmatprep.subr.mxu0 0.0
        %907 = vmatpush1.msra.mxu0 0.0
        %908 = vmatprep.subr.mxu0 0.0
        %909 = vmatpush1.msra.mxu0 0.0
        %910 = vmatprep.subr.mxu0 0.0
        %911 = vmatpush1.msra.mxu0 0.0
        %912 = vmatprep.subr.mxu0 0.0
        %913 = vmatpush1.msra.mxu0 0.0
        %914 = vmatprep.subr.mxu0 0.0
        %915 = vmatpush1.msra.mxu0 0.0
        %916 = vmatprep.subr.mxu0 0.0
        %917 = vmatpush1.msra.mxu0 0.0
        %918 = vmatprep.subr.mxu0 0.0
        %919 = vmatpush1.msra.mxu0 0.0
        %920 = vmatprep.subr.mxu0 0.0
        %921 = vmatpush1.msra.mxu0 0.0
        %922 = vmatprep.subr.mxu0 0.0
        %923 = vmatpush1.msra.mxu0 0.0
        %924 = vmatprep.subr.mxu0 0.0
        %925 = vmatpush1.msra.mxu0 0.0
        %926 = vmatprep.subr.mxu0 0.0
        %927 = vmatpush1.msra.mxu0 0.0
        %928 = vmatprep.subr.mxu0 0.0
        %929 = vmatpush1.msra.mxu0 0.0
        %930 = vmatprep.subr.mxu0 0.0
        %931 = vmatpush1.msra.mxu0 0.0
        %932 = vmatprep.subr.mxu0 0.0
        %933 = vmatpush1.msra.mxu0 0.0
        %934 = vmatprep.subr.mxu0 0.0
        %935 = vmatpush1.msra.mxu0 0.0
        %936 = vmatprep.subr.mxu0 0.0
        %937 = vmatpush1.msra.mxu0 0.0
        %938 = vmatprep.subr.mxu0 0.0
        %939 = vmatpush1.msra.mxu0 0.0
        %940 = vmatprep.subr.mxu0 0.0
        %941 = vmatpush1.msra.mxu0 0.0
        %942 = vmatprep.subr.mxu0 0.0
        %943 = vmatpush1.msra.mxu0 0.0
        %944 = vmatprep.subr.mxu0 0.0
        %945 = vmatpush1.msra.mxu0 0.0
        %946 = vmatprep.subr.mxu0 0.0
        %947 = vmatpush1.msra.mxu0 0.0
        %948 = vmatprep.subr.mxu0 0.0
        %949 = vmatpush1.msra.mxu0 0.0
        %950 = vmatprep.subr.mxu0 0.0
        %951 = vmatpush1.msra.mxu0 0.0
        %952 = vmatprep.subr.mxu0 0.0
        %953 = vmatpush1.msra.mxu0 0.0
        %954 = vmatprep.subr.mxu0 0.0
        %955 = vmatpush1.msra.mxu0 0.0
        %956 = vmatprep.subr.mxu0 0.0
        %957 = vmatpush1.msra.mxu0 0.0
        %958 = vmatprep.subr.mxu0 0.0
        %959 = vmatpush1.msra.mxu0 0.0
        %960 = vmatprep.subr.mxu0 0.0
        %961 = vmatpush1.msra.mxu0 0.0
        %962 = vmatprep.mubr.f32.mxu0 0.0
        %963 = vmatmul.mubr.f32.gmra.mrb[0].mxu0 %v887
        %v964 = vpop.f32.mrb[0].mxu0
        %v965 = vadd.f32 0.0, %v964
        %v966 = vpop.f32.mrb[0].mxu0
        %v967 = vadd.f32 0.0, %v966
        %968 = vmatprep.mubr.f32.mxu0 0.0
        %969 = vmatmul.mubr.f32.gmra.mrb[0].mxu0 %v890
        %v970 = vpop.f32.mrb[0].mxu0
        %v971 = vadd.f32 0.0, %v970
        %v972 = vpop.f32.mrb[0].mxu0
        %v973 = vadd.f32 0.0, %v972
        %974 = vmatprep.mubr.f32.mxu0 0.0
        %975 = vmatmul.mubr.f32.gmra.mrb[0].mxu0 %v893
        %v976 = vpop.f32.mrb[0].mxu0
        %v977 = vadd.f32 0.0, %v976
        %v978 = vpop.f32.mrb[0].mxu0
        %v979 = vadd.f32 0.0, %v978
        %980 = vmatprep.mubr.f32.mxu0 0.0
        %981 = vmatmul.mubr.f32.gmra.mrb[0].mxu0 %v896
        %v982 = vpop.f32.mrb[0].mxu0
        %v983 = vadd.f32 0.0, %v982
        %v984 = vpop.f32.mrb[0].mxu0
        %v985 = vadd.f32 0.0, %v984
        %986 = vdwg.mxu0
        %987 = vst [vmem:[#allocation2] sm:$0xff] %v965
        %988 = vst [vmem:[#allocation2 + $0x8] sm:$0xff] %v967
        %989 = vst [vmem:[#allocation2 + $0x10] sm:$0xff] %v971
        %990 = vst [vmem:[#allocation2 + $0x18] sm:$0xff] %v973
        %991 = vst [vmem:[#allocation2 + $0x20] sm:$0xff] %v977
        %992 = vst [vmem:[#allocation2 + $0x28] sm:$0xff] %v979
        %993 = vst [vmem:[#allocation2 + $0x30] sm:$0xff] %v983
        %994 = vst [vmem:[#allocation2 + $0x38] sm:$0xff] %v985
        %v995 = vmax.f32 %v578, %v580
        %996 = vmax.xlane.f32.xlu0 %v995
        %v997 = vpop.xlane.xlu0 %996
        %v998 = vmax.f32 %v584, %v586
        %999 = vmax.xlane.f32.xlu0 %v998
        %v1000 = vpop.xlane.xlu0 %999
        %v1001 = vmax.f32 %v590, %v592
        %1002 = vmax.xlane.f32.xlu0 %v1001
        %v1003 = vpop.xlane.xlu0 %1002
        %v1004 = vmax.f32 %v596, %v598
        %1005 = vmax.xlane.f32.xlu0 %v1004
        %v1006 = vpop.xlane.xlu0 %1005
        %v1007 = vsub.f32 %v578, %v997
        %v1008 = vsub.f32 %v580, %v997
        %v1009 = vsub.f32 %v584, %v1000
        %v1010 = vsub.f32 %v586, %v1000
        %v1011 = vsub.f32 %v590, %v1003
        %v1012 = vsub.f32 %v592, %v1003
        %v1013 = vsub.f32 %v596, %v1006
        %v1014 = vsub.f32 %v598, %v1006
        %v1015 = vmul.f32 %v1007, 1.442695
        %v1016 = vpow.pop %v1015
        %v1017 = vmul.f32 %v1008, 1.442695
        %v1018 = vpow.pop %v1017
        %v1019 = vmul.f32 %v1009, 1.442695
        %v1020 = vpow.pop %v1019
        %v1021 = vmul.f32 %v1010, 1.442695
        %v1022 = vpow.pop %v1021
        %v1023 = vmul.f32 %v1011, 1.442695
        %v1024 = vpow.pop %v1023
        %v1025 = vmul.f32 %v1012, 1.442695
        %v1026 = vpow.pop %v1025
        %v1027 = vmul.f32 %v1013, 1.442695
        %v1028 = vpow.pop %v1027
        %v1029 = vmul.f32 %v1014, 1.442695
        %v1030 = vpow.pop %v1029
        %v1031 = vadd.f32 %v1016, %v1018
        %1032 = vadd.xlane.f32.xlu0 %v1031
        %v1033 = vpop.xlane.xlu0 %1032
        %v1034 = vadd.f32 %v1020, %v1022
        %1035 = vadd.xlane.f32.xlu0 %v1034
        %v1036 = vpop.xlane.xlu0 %1035
        %v1037 = vadd.f32 %v1024, %v1026
        %1038 = vadd.xlane.f32.xlu0 %v1037
        %v1039 = vpop.xlane.xlu0 %1038
        %v1040 = vadd.f32 %v1028, %v1030
        %1041 = vadd.xlane.f32.xlu0 %v1040
        %v1042 = vpop.xlane.xlu0 %1041
        %1043 = vmatprep.subr.mxu0 %v676
        %1044 = vmatpush1.xpose.msra.mxu0 %v674
        %1045 = vmatprep.subr.mxu0 %v682
        %1046 = vmatpush1.xpose.msra.mxu0 %v680
        %1047 = vmatprep.subr.mxu0 %v688
        %1048 = vmatpush1.xpose.msra.mxu0 %v686
        %1049 = vmatprep.subr.mxu0 %v694
        %1050 = vmatpush1.xpose.msra.mxu0 %v692
        %1051 = vmatprep.subr.mxu0 0.0
        %1052 = vmatpush1.xpose.msra.mxu0 0.0
        %1053 = vmatprep.subr.mxu0 0.0
        %1054 = vmatpush1.xpose.msra.mxu0 0.0
        %1055 = vmatprep.subr.mxu0 0.0
        %1056 = vmatpush1.xpose.msra.mxu0 0.0
        %1057 = vmatprep.subr.mxu0 0.0
        %1058 = vmatpush1.xpose.msra.mxu0 0.0
        %1059 = vmatprep.subr.mxu0 0.0
        %1060 = vmatpush1.xpose.msra.mxu0 0.0
        %1061 = vmatprep.subr.mxu0 0.0
        %1062 = vmatpush1.xpose.msra.mxu0 0.0
        %1063 = vmatprep.subr.mxu0 0.0
        %1064 = vmatpush1.xpose.msra.mxu0 0.0
        %1065 = vmatprep.subr.mxu0 0.0
        %1066 = vmatpush1.xpose.msra.mxu0 0.0
        %1067 = vmatprep.subr.mxu0 0.0
        %1068 = vmatpush1.xpose.msra.mxu0 0.0
        %1069 = vmatprep.subr.mxu0 0.0
        %1070 = vmatpush1.xpose.msra.mxu0 0.0
        %1071 = vmatprep.subr.mxu0 0.0
        %1072 = vmatpush1.xpose.msra.mxu0 0.0
        %1073 = vmatprep.subr.mxu0 0.0
        %1074 = vmatpush1.xpose.msra.mxu0 0.0
        %1075 = vmatprep.subr.mxu0 0.0
        %1076 = vmatpush1.xpose.msra.mxu0 0.0
        %1077 = vmatprep.subr.mxu0 0.0
        %1078 = vmatpush1.xpose.msra.mxu0 0.0
        %1079 = vmatprep.subr.mxu0 0.0
        %1080 = vmatpush1.xpose.msra.mxu0 0.0
        %1081 = vmatprep.subr.mxu0 0.0
        %1082 = vmatpush1.xpose.msra.mxu0 0.0
        %1083 = vmatprep.subr.mxu0 0.0
        %1084 = vmatpush1.xpose.msra.mxu0 0.0
        %1085 = vmatprep.subr.mxu0 0.0
        %1086 = vmatpush1.xpose.msra.mxu0 0.0
        %1087 = vmatprep.subr.mxu0 0.0
        %1088 = vmatpush1.xpose.msra.mxu0 0.0
        %1089 = vmatprep.subr.mxu0 0.0
        %1090 = vmatpush1.xpose.msra.mxu0 0.0
        %1091 = vmatprep.subr.mxu0 0.0
        %1092 = vmatpush1.xpose.msra.mxu0 0.0
        %1093 = vmatprep.subr.mxu0 0.0
        %1094 = vmatpush1.xpose.msra.mxu0 0.0
        %1095 = vmatprep.subr.mxu0 0.0
        %1096 = vmatpush1.xpose.msra.mxu0 0.0
        %1097 = vmatprep.subr.mxu0 0.0
        %1098 = vmatpush1.xpose.msra.mxu0 0.0
        %1099 = vmatprep.subr.mxu0 0.0
        %1100 = vmatpush1.xpose.msra.mxu0 0.0
        %1101 = vmatprep.subr.mxu0 0.0
        %1102 = vmatpush1.xpose.msra.mxu0 0.0
        %1103 = vmatprep.subr.mxu0 0.0
        %1104 = vmatpush1.xpose.msra.mxu0 0.0
        %1105 = vmatprep.subr.mxu0 0.0
        %1106 = vmatpush1.xpose.msra.mxu0 0.0
        %1107 = vmatprep.mubr.f32.mxu0 %v1018
        %1108 = vmatmul.mubr.f32.gmra.mrb[0].mxu0 %v1016
        %v1109 = vpop.f32.mrb[0].mxu0
        %v1110 = vadd.f32 0.0, %v1109
        %v1111 = vpop.f32.mrb[0].mxu0
        %1112 = vmatprep.mubr.f32.mxu0 %v1022
        %1113 = vmatmul.mubr.f32.gmra.mrb[0].mxu0 %v1020
        %v1114 = vpop.f32.mrb[0].mxu0
        %v1115 = vadd.f32 0.0, %v1114
        %v1116 = vpop.f32.mrb[0].mxu0
        %1117 = vmatprep.mubr.f32.mxu0 %v1026
        %1118 = vmatmul.mubr.f32.gmra.mrb[0].mxu0 %v1024
        %v1119 = vpop.f32.mrb[0].mxu0
        %v1120 = vadd.f32 0.0, %v1119
        %v1121 = vpop.f32.mrb[0].mxu0
        %1122 = vmatprep.mubr.f32.mxu0 %v1030
        %1123 = vmatmul.mubr.f32.gmra.mrb[0].mxu0 %v1028
        %v1124 = vpop.f32.mrb[0].mxu0
        %v1125 = vadd.f32 0.0, %v1124
        %v1126 = vpop.f32.mrb[0].mxu0
        %1127 = vdwg.mxu0
        %v1128 = vrcp.pop %v1033
        %v1129 = vrcp.pop %v1036
        %v1130 = vrcp.pop %v1039
        %v1131 = vrcp.pop %v1042
        %v1132 = vmul.f32 %v1110, %v1128
        %v1133 = vmul.f32 %v1115, %v1129
        %v1134 = vmul.f32 %v1120, %v1130
        %v1135 = vmul.f32 %v1125, %v1131
        %v1137 = vsel %vm885, %v1132, 0
        %v1140 = vsel %vm885, %v1133, 0
        %v1143 = vsel %vm885, %v1134, 0
        %v1146 = vsel %vm885, %v1135, 0
        %1148 = vmatprep.subr.mxu0 %v484
        %1149 = vmatpush1.msra.mxu0 %v482
        %1150 = vmatprep.subr.mxu0 %v490
        %1151 = vmatpush1.msra.mxu0 %v488
        %1152 = vmatprep.subr.mxu0 %v496
        %1153 = vmatpush1.msra.mxu0 %v494
        %1154 = vmatprep.subr.mxu0 %v502
        %1155 = vmatpush1.msra.mxu0 %v500
        %1156 = vmatprep.subr.mxu0 0.0
        %1157 = vmatpush1.msra.mxu0 0.0
        %1158 = vmatprep.subr.mxu0 0.0
        %1159 = vmatpush1.msra.mxu0 0.0
        %1160 = vmatprep.subr.mxu0 0.0
        %1161 = vmatpush1.msra.mxu0 0.0
        %1162 = vmatprep.subr.mxu0 0.0
        %1163 = vmatpush1.msra.mxu0 0.0
        %1164 = vmatprep.subr.mxu0 0.0
        %1165 = vmatpush1.msra.mxu0 0.0
        %1166 = vmatprep.subr.mxu0 0.0
        %1167 = vmatpush1.msra.mxu0 0.0
        %1168 = vmatprep.subr.mxu0 0.0
        %1169 = vmatpush1.msra.mxu0 0.0
        %1170 = vmatprep.subr.mxu0 0.0
        %1171 = vmatpush1.msra.mxu0 0.0
        %1172 = vmatprep.subr.mxu0 0.0
        %1173 = vmatpush1.msra.mxu0 0.0
        %1174 = vmatprep.subr.mxu0 0.0
        %1175 = vmatpush1.msra.mxu0 0.0
        %1176 = vmatprep.subr.mxu0 0.0
        %1177 = vmatpush1.msra.mxu0 0.0
        %1178 = vmatprep.subr.mxu0 0.0
        %1179 = vmatpush1.msra.mxu0 0.0
        %1180 = vmatprep.subr.mxu0 0.0
        %1181 = vmatpush1.msra.mxu0 0.0
        %1182 = vmatprep.subr.mxu0 0.0
        %1183 = vmatpush1.msra.mxu0 0.0
        %1184 = vmatprep.subr.mxu0 0.0
        %1185 = vmatpush1.msra.mxu0 0.0
        %1186 = vmatprep.subr.mxu0 0.0
        %1187 = vmatpush1.msra.mxu0 0.0
        %1188 = vmatprep.subr.mxu0 0.0
        %1189 = vmatpush1.msra.mxu0 0.0
        %1190 = vmatprep.subr.mxu0 0.0
        %1191 = vmatpush1.msra.mxu0 0.0
        %1192 = vmatprep.subr.mxu0 0.0
        %1193 = vmatpush1.msra.mxu0 0.0
        %1194 = vmatprep.subr.mxu0 0.0
        %1195 = vmatpush1.msra.mxu0 0.0
        %1196 = vmatprep.subr.mxu0 0.0
        %1197 = vmatpush1.msra.mxu0 0.0
        %1198 = vmatprep.subr.mxu0 0.0
        %1199 = vmatpush1.msra.mxu0 0.0
        %1200 = vmatprep.subr.mxu0 0.0
        %1201 = vmatpush1.msra.mxu0 0.0
        %1202 = vmatprep.subr.mxu0 0.0
        %1203 = vmatpush1.msra.mxu0 0.0
        %1204 = vmatprep.subr.mxu0 0.0
        %1205 = vmatpush1.msra.mxu0 0.0
        %1206 = vmatprep.subr.mxu0 0.0
        %1207 = vmatpush1.msra.mxu0 0.0
        %1208 = vmatprep.subr.mxu0 0.0
        %1209 = vmatpush1.msra.mxu0 0.0
        %1210 = vmatprep.subr.mxu0 0.0
        %1211 = vmatpush1.msra.mxu0 0.0
        %1212 = vmatprep.mubr.f32.mxu0 0.0
        %1213 = vmatmul.mubr.f32.gmra.mrb[0].mxu0 %v1137
        %v1214 = vpop.f32.mrb[0].mxu0
        %v1215 = vadd.f32 0.0, %v1214
        %v1216 = vpop.f32.mrb[0].mxu0
        %v1217 = vadd.f32 0.0, %v1216
        %1218 = vmatprep.mubr.f32.mxu0 0.0
        %1219 = vmatmul.mubr.f32.gmra.mrb[0].mxu0 %v1140
        %v1220 = vpop.f32.mrb[0].mxu0
        %v1221 = vadd.f32 0.0, %v1220
        %v1222 = vpop.f32.mrb[0].mxu0
        %v1223 = vadd.f32 0.0, %v1222
        %1224 = vmatprep.mubr.f32.mxu0 0.0
        %1225 = vmatmul.mubr.f32.gmra.mrb[0].mxu0 %v1143
        %v1226 = vpop.f32.mrb[0].mxu0
        %v1227 = vadd.f32 0.0, %v1226
        %v1228 = vpop.f32.mrb[0].mxu0
        %v1229 = vadd.f32 0.0, %v1228
        %1230 = vmatprep.mubr.f32.mxu0 0.0
        %1231 = vmatmul.mubr.f32.gmra.mrb[0].mxu0 %v1146
        %v1232 = vpop.f32.mrb[0].mxu0
        %v1233 = vadd.f32 0.0, %v1232
        %v1234 = vpop.f32.mrb[0].mxu0
        %v1235 = vadd.f32 0.0, %v1234
        %1236 = vdwg.mxu0
        %1237 = vst [vmem:[#allocation2 + $0x40] sm:$0xff] %v1215
        %1238 = vst [vmem:[#allocation2 + $0x48] sm:$0xff] %v1217
        %1239 = vst [vmem:[#allocation2 + $0x50] sm:$0xff] %v1221
        %1240 = vst [vmem:[#allocation2 + $0x58] sm:$0xff] %v1223
        %1241 = vst [vmem:[#allocation2 + $0x60] sm:$0xff] %v1227
        %1242 = vst [vmem:[#allocation2 + $0x68] sm:$0xff] %v1229
        %1243 = vst [vmem:[#allocation2 + $0x70] sm:$0xff] %v1233
        %1244 = vst [vmem:[#allocation2 + $0x78] sm:$0xff] %v1235
        %v1245 = vmax.f32 %v602, %v604
        %1246 = vmax.xlane.f32.xlu0 %v1245
        %v1247 = vpop.xlane.xlu0 %1246
        %v1248 = vmax.f32 %v608, %v610
        %1249 = vmax.xlane.f32.xlu0 %v1248
        %v1250 = vpop.xlane.xlu0 %1249
        %v1251 = vmax.f32 %v614, %v616
        %1252 = vmax.xlane.f32.xlu0 %v1251
        %v1253 = vpop.xlane.xlu0 %1252
        %v1254 = vmax.f32 %v620, %v622
        %1255 = vmax.xlane.f32.xlu0 %v1254
        %v1256 = vpop.xlane.xlu0 %1255
        %v1257 = vsub.f32 %v602, %v1247
        %v1258 = vsub.f32 %v604, %v1247
        %v1259 = vsub.f32 %v608, %v1250
        %v1260 = vsub.f32 %v610, %v1250
        %v1261 = vsub.f32 %v614, %v1253
        %v1262 = vsub.f32 %v616, %v1253
        %v1263 = vsub.f32 %v620, %v1256
        %v1264 = vsub.f32 %v622, %v1256
        %v1265 = vmul.f32 %v1257, 1.442695
        %v1266 = vpow.pop %v1265
        %v1267 = vmul.f32 %v1258, 1.442695
        %v1268 = vpow.pop %v1267
        %v1269 = vmul.f32 %v1259, 1.442695
        %v1270 = vpow.pop %v1269
        %v1271 = vmul.f32 %v1260, 1.442695
        %v1272 = vpow.pop %v1271
        %v1273 = vmul.f32 %v1261, 1.442695
        %v1274 = vpow.pop %v1273
        %v1275 = vmul.f32 %v1262, 1.442695
        %v1276 = vpow.pop %v1275
        %v1277 = vmul.f32 %v1263, 1.442695
        %v1278 = vpow.pop %v1277
        %v1279 = vmul.f32 %v1264, 1.442695
        %v1280 = vpow.pop %v1279
        %v1281 = vadd.f32 %v1266, %v1268
        %1282 = vadd.xlane.f32.xlu0 %v1281
        %v1283 = vpop.xlane.xlu0 %1282
        %v1284 = vadd.f32 %v1270, %v1272
        %1285 = vadd.xlane.f32.xlu0 %v1284
        %v1286 = vpop.xlane.xlu0 %1285
        %v1287 = vadd.f32 %v1274, %v1276
        %1288 = vadd.xlane.f32.xlu0 %v1287
        %v1289 = vpop.xlane.xlu0 %1288
        %v1290 = vadd.f32 %v1278, %v1280
        %1291 = vadd.xlane.f32.xlu0 %v1290
        %v1292 = vpop.xlane.xlu0 %1291
        %1293 = vmatprep.subr.mxu0 %v700
        %1294 = vmatpush1.xpose.msra.mxu0 %v698
        %1295 = vmatprep.subr.mxu0 %v706
        %1296 = vmatpush1.xpose.msra.mxu0 %v704
        %1297 = vmatprep.subr.mxu0 %v712
        %1298 = vmatpush1.xpose.msra.mxu0 %v710
        %1299 = vmatprep.subr.mxu0 %v718
        %1300 = vmatpush1.xpose.msra.mxu0 %v716
        %1301 = vmatprep.subr.mxu0 0.0
        %1302 = vmatpush1.xpose.msra.mxu0 0.0
        %1303 = vmatprep.subr.mxu0 0.0
        %1304 = vmatpush1.xpose.msra.mxu0 0.0
        %1305 = vmatprep.subr.mxu0 0.0
        %1306 = vmatpush1.xpose.msra.mxu0 0.0
        %1307 = vmatprep.subr.mxu0 0.0
        %1308 = vmatpush1.xpose.msra.mxu0 0.0
        %1309 = vmatprep.subr.mxu0 0.0
        %1310 = vmatpush1.xpose.msra.mxu0 0.0
        %1311 = vmatprep.subr.mxu0 0.0
        %1312 = vmatpush1.xpose.msra.mxu0 0.0
        %1313 = vmatprep.subr.mxu0 0.0
        %1314 = vmatpush1.xpose.msra.mxu0 0.0
        %1315 = vmatprep.subr.mxu0 0.0
        %1316 = vmatpush1.xpose.msra.mxu0 0.0
        %1317 = vmatprep.subr.mxu0 0.0
        %1318 = vmatpush1.xpose.msra.mxu0 0.0
        %1319 = vmatprep.subr.mxu0 0.0
        %1320 = vmatpush1.xpose.msra.mxu0 0.0
        %1321 = vmatprep.subr.mxu0 0.0
        %1322 = vmatpush1.xpose.msra.mxu0 0.0
        %1323 = vmatprep.subr.mxu0 0.0
        %1324 = vmatpush1.xpose.msra.mxu0 0.0
        %1325 = vmatprep.subr.mxu0 0.0
        %1326 = vmatpush1.xpose.msra.mxu0 0.0
        %1327 = vmatprep.subr.mxu0 0.0
        %1328 = vmatpush1.xpose.msra.mxu0 0.0
        %1329 = vmatprep.subr.mxu0 0.0
        %1330 = vmatpush1.xpose.msra.mxu0 0.0
        %1331 = vmatprep.subr.mxu0 0.0
        %1332 = vmatpush1.xpose.msra.mxu0 0.0
        %1333 = vmatprep.subr.mxu0 0.0
        %1334 = vmatpush1.xpose.msra.mxu0 0.0
        %1335 = vmatprep.subr.mxu0 0.0
        %1336 = vmatpush1.xpose.msra.mxu0 0.0
        %1337 = vmatprep.subr.mxu0 0.0
        %1338 = vmatpush1.xpose.msra.mxu0 0.0
        %1339 = vmatprep.subr.mxu0 0.0
        %1340 = vmatpush1.xpose.msra.mxu0 0.0
        %1341 = vmatprep.subr.mxu0 0.0
        %1342 = vmatpush1.xpose.msra.mxu0 0.0
        %1343 = vmatprep.subr.mxu0 0.0
        %1344 = vmatpush1.xpose.msra.mxu0 0.0
        %1345 = vmatprep.subr.mxu0 0.0
        %1346 = vmatpush1.xpose.msra.mxu0 0.0
        %1347 = vmatprep.subr.mxu0 0.0
        %1348 = vmatpush1.xpose.msra.mxu0 0.0
        %1349 = vmatprep.subr.mxu0 0.0
        %1350 = vmatpush1.xpose.msra.mxu0 0.0
        %1351 = vmatprep.subr.mxu0 0.0
        %1352 = vmatpush1.xpose.msra.mxu0 0.0
        %1353 = vmatprep.subr.mxu0 0.0
        %1354 = vmatpush1.xpose.msra.mxu0 0.0
        %1355 = vmatprep.subr.mxu0 0.0
        %1356 = vmatpush1.xpose.msra.mxu0 0.0
        %1357 = vmatprep.mubr.f32.mxu0 %v1268
        %1358 = vmatmul.mubr.f32.gmra.mrb[0].mxu0 %v1266
        %v1359 = vpop.f32.mrb[0].mxu0
        %v1360 = vadd.f32 0.0, %v1359
        %v1361 = vpop.f32.mrb[0].mxu0
        %1362 = vmatprep.mubr.f32.mxu0 %v1272
        %1363 = vmatmul.mubr.f32.gmra.mrb[0].mxu0 %v1270
        %v1364 = vpop.f32.mrb[0].mxu0
        %v1365 = vadd.f32 0.0, %v1364
        %v1366 = vpop.f32.mrb[0].mxu0
        %1367 = vmatprep.mubr.f32.mxu0 %v1276
        %1368 = vmatmul.mubr.f32.gmra.mrb[0].mxu0 %v1274
        %v1369 = vpop.f32.mrb[0].mxu0
        %v1370 = vadd.f32 0.0, %v1369
        %v1371 = vpop.f32.mrb[0].mxu0
        %1372 = vmatprep.mubr.f32.mxu0 %v1280
        %1373 = vmatmul.mubr.f32.gmra.mrb[0].mxu0 %v1278
        %v1374 = vpop.f32.mrb[0].mxu0
        %v1375 = vadd.f32 0.0, %v1374
        %v1376 = vpop.f32.mrb[0].mxu0
        %1377 = vdwg.mxu0
        %v1378 = vrcp.pop %v1283
        %v1379 = vrcp.pop %v1286
        %v1380 = vrcp.pop %v1289
        %v1381 = vrcp.pop %v1292
        %v1382 = vmul.f32 %v1360, %v1378
        %v1383 = vmul.f32 %v1365, %v1379
        %v1384 = vmul.f32 %v1370, %v1380
        %v1385 = vmul.f32 %v1375, %v1381
        %v1387 = vsel %vm885, %v1382, 0
        %v1390 = vsel %vm885, %v1383, 0
        %v1393 = vsel %vm885, %v1384, 0
        %v1396 = vsel %vm885, %v1385, 0
        %1398 = vmatprep.subr.mxu0 %v508
        %1399 = vmatpush1.msra.mxu0 %v506
        %1400 = vmatprep.subr.mxu0 %v514
        %1401 = vmatpush1.msra.mxu0 %v512
        %1402 = vmatprep.subr.mxu0 %v520
        %1403 = vmatpush1.msra.mxu0 %v518
        %1404 = vmatprep.subr.mxu0 %v526
        %1405 = vmatpush1.msra.mxu0 %v524
        %1406 = vmatprep.subr.mxu0 0.0
        %1407 = vmatpush1.msra.mxu0 0.0
        %1408 = vmatprep.subr.mxu0 0.0
        %1409 = vmatpush1.msra.mxu0 0.0
        %1410 = vmatprep.subr.mxu0 0.0
        %1411 = vmatpush1.msra.mxu0 0.0
        %1412 = vmatprep.subr.mxu0 0.0
        %1413 = vmatpush1.msra.mxu0 0.0
        %1414 = vmatprep.subr.mxu0 0.0
        %1415 = vmatpush1.msra.mxu0 0.0
        %1416 = vmatprep.subr.mxu0 0.0
        %1417 = vmatpush1.msra.mxu0 0.0
        %1418 = vmatprep.subr.mxu0 0.0
        %1419 = vmatpush1.msra.mxu0 0.0
        %1420 = vmatprep.subr.mxu0 0.0
        %1421 = vmatpush1.msra.mxu0 0.0
        %1422 = vmatprep.subr.mxu0 0.0
        %1423 = vmatpush1.msra.mxu0 0.0
        %1424 = vmatprep.subr.mxu0 0.0
        %1425 = vmatpush1.msra.mxu0 0.0
        %1426 = vmatprep.subr.mxu0 0.0
        %1427 = vmatpush1.msra.mxu0 0.0
        %1428 = vmatprep.subr.mxu0 0.0
        %1429 = vmatpush1.msra.mxu0 0.0
        %1430 = vmatprep.subr.mxu0 0.0
        %1431 = vmatpush1.msra.mxu0 0.0
        %1432 = vmatprep.subr.mxu0 0.0
        %1433 = vmatpush1.msra.mxu0 0.0
        %1434 = vmatprep.subr.mxu0 0.0
        %1435 = vmatpush1.msra.mxu0 0.0
        %1436 = vmatprep.subr.mxu0 0.0
        %1437 = vmatpush1.msra.mxu0 0.0
        %1438 = vmatprep.subr.mxu0 0.0
        %1439 = vmatpush1.msra.mxu0 0.0
        %1440 = vmatprep.subr.mxu0 0.0
        %1441 = vmatpush1.msra.mxu0 0.0
        %1442 = vmatprep.subr.mxu0 0.0
        %1443 = vmatpush1.msra.mxu0 0.0
        %1444 = vmatprep.subr.mxu0 0.0
        %1445 = vmatpush1.msra.mxu0 0.0
        %1446 = vmatprep.subr.mxu0 0.0
        %1447 = vmatpush1.msra.mxu0 0.0
        %1448 = vmatprep.subr.mxu0 0.0
        %1449 = vmatpush1.msra.mxu0 0.0
        %1450 = vmatprep.subr.mxu0 0.0
        %1451 = vmatpush1.msra.mxu0 0.0
        %1452 = vmatprep.subr.mxu0 0.0
        %1453 = vmatpush1.msra.mxu0 0.0
        %1454 = vmatprep.subr.mxu0 0.0
        %1455 = vmatpush1.msra.mxu0 0.0
        %1456 = vmatprep.subr.mxu0 0.0
        %1457 = vmatpush1.msra.mxu0 0.0
        %1458 = vmatprep.subr.mxu0 0.0
        %1459 = vmatpush1.msra.mxu0 0.0
        %1460 = vmatprep.subr.mxu0 0.0
        %1461 = vmatpush1.msra.mxu0 0.0
        %1462 = vmatprep.mubr.f32.mxu0 0.0
        %1463 = vmatmul.mubr.f32.gmra.mrb[0].mxu0 %v1387
        %v1464 = vpop.f32.mrb[0].mxu0
        %v1465 = vadd.f32 0.0, %v1464
        %v1466 = vpop.f32.mrb[0].mxu0
        %v1467 = vadd.f32 0.0, %v1466
        %1468 = vmatprep.mubr.f32.mxu0 0.0
        %1469 = vmatmul.mubr.f32.gmra.mrb[0].mxu0 %v1390
        %v1470 = vpop.f32.mrb[0].mxu0
        %v1471 = vadd.f32 0.0, %v1470
        %v1472 = vpop.f32.mrb[0].mxu0
        %v1473 = vadd.f32 0.0, %v1472
        %1474 = vmatprep.mubr.f32.mxu0 0.0
        %1475 = vmatmul.mubr.f32.gmra.mrb[0].mxu0 %v1393
        %v1476 = vpop.f32.mrb[0].mxu0
        %v1477 = vadd.f32 0.0, %v1476
        %v1478 = vpop.f32.mrb[0].mxu0
        %v1479 = vadd.f32 0.0, %v1478
        %1480 = vmatprep.mubr.f32.mxu0 0.0
        %1481 = vmatmul.mubr.f32.gmra.mrb[0].mxu0 %v1396
        %v1482 = vpop.f32.mrb[0].mxu0
        %v1483 = vadd.f32 0.0, %v1482
        %v1484 = vpop.f32.mrb[0].mxu0
        %v1485 = vadd.f32 0.0, %v1484
        %1486 = vdwg.mxu0
        %1487 = vst [vmem:[#allocation2 + $0x80] sm:$0xff] %v1465
        %1488 = vst [vmem:[#allocation2 + $0x88] sm:$0xff] %v1467
        %1489 = vst [vmem:[#allocation2 + $0x90] sm:$0xff] %v1471
        %1490 = vst [vmem:[#allocation2 + $0x98] sm:$0xff] %v1473
        %1491 = vst [vmem:[#allocation2 + $0xa0] sm:$0xff] %v1477
        %1492 = vst [vmem:[#allocation2 + $0xa8] sm:$0xff] %v1479
        %1493 = vst [vmem:[#allocation2 + $0xb0] sm:$0xff] %v1483
        %1494 = vst [vmem:[#allocation2 + $0xb8] sm:$0xff] %v1485
        %v1495 = vmax.f32 %v626, %v628
        %1496 = vmax.xlane.f32.xlu0 %v1495
        %v1497 = vpop.xlane.xlu0 %1496
        %v1498 = vmax.f32 %v632, %v634
        %1499 = vmax.xlane.f32.xlu0 %v1498
        %v1500 = vpop.xlane.xlu0 %1499
        %v1501 = vmax.f32 %v638, %v640
        %1502 = vmax.xlane.f32.xlu0 %v1501
        %v1503 = vpop.xlane.xlu0 %1502
        %v1504 = vmax.f32 %v644, %v646
        %1505 = vmax.xlane.f32.xlu0 %v1504
        %v1506 = vpop.xlane.xlu0 %1505
        %v1507 = vsub.f32 %v626, %v1497
        %v1508 = vsub.f32 %v628, %v1497
        %v1509 = vsub.f32 %v632, %v1500
        %v1510 = vsub.f32 %v634, %v1500
        %v1511 = vsub.f32 %v638, %v1503
        %v1512 = vsub.f32 %v640, %v1503
        %v1513 = vsub.f32 %v644, %v1506
        %v1514 = vsub.f32 %v646, %v1506
        %v1515 = vmul.f32 %v1507, 1.442695
        %v1516 = vpow.pop %v1515
        %v1517 = vmul.f32 %v1508, 1.442695
        %v1518 = vpow.pop %v1517
        %v1519 = vmul.f32 %v1509, 1.442695
        %v1520 = vpow.pop %v1519
        %v1521 = vmul.f32 %v1510, 1.442695
        %v1522 = vpow.pop %v1521
        %v1523 = vmul.f32 %v1511, 1.442695
        %v1524 = vpow.pop %v1523
        %v1525 = vmul.f32 %v1512, 1.442695
        %v1526 = vpow.pop %v1525
        %v1527 = vmul.f32 %v1513, 1.442695
        %v1528 = vpow.pop %v1527
        %v1529 = vmul.f32 %v1514, 1.442695
        %v1530 = vpow.pop %v1529
        %v1531 = vadd.f32 %v1516, %v1518
        %1532 = vadd.xlane.f32.xlu0 %v1531
        %v1533 = vpop.xlane.xlu0 %1532
        %v1534 = vadd.f32 %v1520, %v1522
        %1535 = vadd.xlane.f32.xlu0 %v1534
        %v1536 = vpop.xlane.xlu0 %1535
        %v1537 = vadd.f32 %v1524, %v1526
        %1538 = vadd.xlane.f32.xlu0 %v1537
        %v1539 = vpop.xlane.xlu0 %1538
        %v1540 = vadd.f32 %v1528, %v1530
        %1541 = vadd.xlane.f32.xlu0 %v1540
        %v1542 = vpop.xlane.xlu0 %1541
        %1543 = vmatprep.subr.mxu0 %v724
        %1544 = vmatpush1.xpose.msra.mxu0 %v722
        %1545 = vmatprep.subr.mxu0 %v730
        %1546 = vmatpush1.xpose.msra.mxu0 %v728
        %1547 = vmatprep.subr.mxu0 %v736
        %1548 = vmatpush1.xpose.msra.mxu0 %v734
        %1549 = vmatprep.subr.mxu0 %v742
        %1550 = vmatpush1.xpose.msra.mxu0 %v740
        %1551 = vmatprep.subr.mxu0 0.0
        %1552 = vmatpush1.xpose.msra.mxu0 0.0
        %1553 = vmatprep.subr.mxu0 0.0
        %1554 = vmatpush1.xpose.msra.mxu0 0.0
        %1555 = vmatprep.subr.mxu0 0.0
        %1556 = vmatpush1.xpose.msra.mxu0 0.0
        %1557 = vmatprep.subr.mxu0 0.0
        %1558 = vmatpush1.xpose.msra.mxu0 0.0
        %1559 = vmatprep.subr.mxu0 0.0
        %1560 = vmatpush1.xpose.msra.mxu0 0.0
        %1561 = vmatprep.subr.mxu0 0.0
        %1562 = vmatpush1.xpose.msra.mxu0 0.0
        %1563 = vmatprep.subr.mxu0 0.0
        %1564 = vmatpush1.xpose.msra.mxu0 0.0
        %1565 = vmatprep.subr.mxu0 0.0
        %1566 = vmatpush1.xpose.msra.mxu0 0.0
        %1567 = vmatprep.subr.mxu0 0.0
        %1568 = vmatpush1.xpose.msra.mxu0 0.0
        %1569 = vmatprep.subr.mxu0 0.0
        %1570 = vmatpush1.xpose.msra.mxu0 0.0
        %1571 = vmatprep.subr.mxu0 0.0
        %1572 = vmatpush1.xpose.msra.mxu0 0.0
        %1573 = vmatprep.subr.mxu0 0.0
        %1574 = vmatpush1.xpose.msra.mxu0 0.0
        %1575 = vmatprep.subr.mxu0 0.0
        %1576 = vmatpush1.xpose.msra.mxu0 0.0
        %1577 = vmatprep.subr.mxu0 0.0
        %1578 = vmatpush1.xpose.msra.mxu0 0.0
        %1579 = vmatprep.subr.mxu0 0.0
        %1580 = vmatpush1.xpose.msra.mxu0 0.0
        %1581 = vmatprep.subr.mxu0 0.0
        %1582 = vmatpush1.xpose.msra.mxu0 0.0
        %1583 = vmatprep.subr.mxu0 0.0
        %1584 = vmatpush1.xpose.msra.mxu0 0.0
        %1585 = vmatprep.subr.mxu0 0.0
        %1586 = vmatpush1.xpose.msra.mxu0 0.0
        %1587 = vmatprep.subr.mxu0 0.0
        %1588 = vmatpush1.xpose.msra.mxu0 0.0
        %1589 = vmatprep.subr.mxu0 0.0
        %1590 = vmatpush1.xpose.msra.mxu0 0.0
        %1591 = vmatprep.subr.mxu0 0.0
        %1592 = vmatpush1.xpose.msra.mxu0 0.0
        %1593 = vmatprep.subr.mxu0 0.0
        %1594 = vmatpush1.xpose.msra.mxu0 0.0
        %1595 = vmatprep.subr.mxu0 0.0
        %1596 = vmatpush1.xpose.msra.mxu0 0.0
        %1597 = vmatprep.subr.mxu0 0.0
        %1598 = vmatpush1.xpose.msra.mxu0 0.0
        %1599 = vmatprep.subr.mxu0 0.0
        %1600 = vmatpush1.xpose.msra.mxu0 0.0
        %1601 = vmatprep.subr.mxu0 0.0
        %1602 = vmatpush1.xpose.msra.mxu0 0.0
        %1603 = vmatprep.subr.mxu0 0.0
        %1604 = vmatpush1.xpose.msra.mxu0 0.0
        %1605 = vmatprep.subr.mxu0 0.0
        %1606 = vmatpush1.xpose.msra.mxu0 0.0
        %1607 = vmatprep.mubr.f32.mxu0 %v1518
        %1608 = vmatmul.mubr.f32.gmra.mrb[0].mxu0 %v1516
        %v1609 = vpop.f32.mrb[0].mxu0
        %v1610 = vadd.f32 0.0, %v1609
        %v1611 = vpop.f32.mrb[0].mxu0
        %1612 = vmatprep.mubr.f32.mxu0 %v1522
        %1613 = vmatmul.mubr.f32.gmra.mrb[0].mxu0 %v1520
        %v1614 = vpop.f32.mrb[0].mxu0
        %v1615 = vadd.f32 0.0, %v1614
        %v1616 = vpop.f32.mrb[0].mxu0
        %1617 = vmatprep.mubr.f32.mxu0 %v1526
        %1618 = vmatmul.mubr.f32.gmra.mrb[0].mxu0 %v1524
        %v1619 = vpop.f32.mrb[0].mxu0
        %v1620 = vadd.f32 0.0, %v1619
        %v1621 = vpop.f32.mrb[0].mxu0
        %1622 = vmatprep.mubr.f32.mxu0 %v1530
        %1623 = vmatmul.mubr.f32.gmra.mrb[0].mxu0 %v1528
        %v1624 = vpop.f32.mrb[0].mxu0
        %v1625 = vadd.f32 0.0, %v1624
        %v1626 = vpop.f32.mrb[0].mxu0
        %1627 = vdwg.mxu0
        %v1628 = vrcp.pop %v1533
        %v1629 = vrcp.pop %v1536
        %v1630 = vrcp.pop %v1539
        %v1631 = vrcp.pop %v1542
        %v1632 = vmul.f32 %v1610, %v1628
        %v1633 = vmul.f32 %v1615, %v1629
        %v1634 = vmul.f32 %v1620, %v1630
        %v1635 = vmul.f32 %v1625, %v1631
        %v1637 = vsel %vm885, %v1632, 0
        %v1640 = vsel %vm885, %v1633, 0
        %v1643 = vsel %vm885, %v1634, 0
        %v1646 = vsel %vm885, %v1635, 0
        %1648 = vmatprep.subr.mxu0 %v532
        %1649 = vmatpush1.msra.mxu0 %v530
        %1650 = vmatprep.subr.mxu0 %v538
        %1651 = vmatpush1.msra.mxu0 %v536
        %1652 = vmatprep.subr.mxu0 %v544
        %1653 = vmatpush1.msra.mxu0 %v542
        %1654 = vmatprep.subr.mxu0 %v550
        %1655 = vmatpush1.msra.mxu0 %v548
        %1656 = vmatprep.subr.mxu0 0.0
        %1657 = vmatpush1.msra.mxu0 0.0
        %1658 = vmatprep.subr.mxu0 0.0
        %1659 = vmatpush1.msra.mxu0 0.0
        %1660 = vmatprep.subr.mxu0 0.0
        %1661 = vmatpush1.msra.mxu0 0.0
        %1662 = vmatprep.subr.mxu0 0.0
        %1663 = vmatpush1.msra.mxu0 0.0
        %1664 = vmatprep.subr.mxu0 0.0
        %1665 = vmatpush1.msra.mxu0 0.0
        %1666 = vmatprep.subr.mxu0 0.0
        %1667 = vmatpush1.msra.mxu0 0.0
        %1668 = vmatprep.subr.mxu0 0.0
        %1669 = vmatpush1.msra.mxu0 0.0
        %1670 = vmatprep.subr.mxu0 0.0
        %1671 = vmatpush1.msra.mxu0 0.0
        %1672 = vmatprep.subr.mxu0 0.0
        %1673 = vmatpush1.msra.mxu0 0.0
        %1674 = vmatprep.subr.mxu0 0.0
        %1675 = vmatpush1.msra.mxu0 0.0
        %1676 = vmatprep.subr.mxu0 0.0
        %1677 = vmatpush1.msra.mxu0 0.0
        %1678 = vmatprep.subr.mxu0 0.0
        %1679 = vmatpush1.msra.mxu0 0.0
        %1680 = vmatprep.subr.mxu0 0.0
        %1681 = vmatpush1.msra.mxu0 0.0
        %1682 = vmatprep.subr.mxu0 0.0
        %1683 = vmatpush1.msra.mxu0 0.0
        %1684 = vmatprep.subr.mxu0 0.0
        %1685 = vmatpush1.msra.mxu0 0.0
        %1686 = vmatprep.subr.mxu0 0.0
        %1687 = vmatpush1.msra.mxu0 0.0
        %1688 = vmatprep.subr.mxu0 0.0
        %1689 = vmatpush1.msra.mxu0 0.0
        %1690 = vmatprep.subr.mxu0 0.0
        %1691 = vmatpush1.msra.mxu0 0.0
        %1692 = vmatprep.subr.mxu0 0.0
        %1693 = vmatpush1.msra.mxu0 0.0
        %1694 = vmatprep.subr.mxu0 0.0
        %1695 = vmatpush1.msra.mxu0 0.0
        %1696 = vmatprep.subr.mxu0 0.0
        %1697 = vmatpush1.msra.mxu0 0.0
        %1698 = vmatprep.subr.mxu0 0.0
        %1699 = vmatpush1.msra.mxu0 0.0
        %1700 = vmatprep.subr.mxu0 0.0
        %1701 = vmatpush1.msra.mxu0 0.0
        %1702 = vmatprep.subr.mxu0 0.0
        %1703 = vmatpush1.msra.mxu0 0.0
        %1704 = vmatprep.subr.mxu0 0.0
        %1705 = vmatpush1.msra.mxu0 0.0
        %1706 = vmatprep.subr.mxu0 0.0
        %1707 = vmatpush1.msra.mxu0 0.0
        %1708 = vmatprep.subr.mxu0 0.0
        %1709 = vmatpush1.msra.mxu0 0.0
        %1710 = vmatprep.subr.mxu0 0.0
        %1711 = vmatpush1.msra.mxu0 0.0
        %1712 = vmatprep.mubr.f32.mxu0 0.0
        %1713 = vmatmul.mubr.f32.gmra.mrb[0].mxu0 %v1637
        %v1714 = vpop.f32.mrb[0].mxu0
        %v1715 = vadd.f32 0.0, %v1714
        %v1716 = vpop.f32.mrb[0].mxu0
        %v1717 = vadd.f32 0.0, %v1716
        %1718 = vmatprep.mubr.f32.mxu0 0.0
        %1719 = vmatmul.mubr.f32.gmra.mrb[0].mxu0 %v1640
        %v1720 = vpop.f32.mrb[0].mxu0
        %v1721 = vadd.f32 0.0, %v1720
        %v1722 = vpop.f32.mrb[0].mxu0
        %v1723 = vadd.f32 0.0, %v1722
        %1724 = vmatprep.mubr.f32.mxu0 0.0
        %1725 = vmatmul.mubr.f32.gmra.mrb[0].mxu0 %v1643
        %v1726 = vpop.f32.mrb[0].mxu0
        %v1727 = vadd.f32 0.0, %v1726
        %v1728 = vpop.f32.mrb[0].mxu0
        %v1729 = vadd.f32 0.0, %v1728
        %1730 = vmatprep.mubr.f32.mxu0 0.0
        %1731 = vmatmul.mubr.f32.gmra.mrb[0].mxu0 %v1646
        %v1732 = vpop.f32.mrb[0].mxu0
        %v1733 = vadd.f32 0.0, %v1732
        %v1734 = vpop.f32.mrb[0].mxu0
        %v1735 = vadd.f32 0.0, %v1734
        %1736 = vdwg.mxu0
        %1737 = vst [vmem:[#allocation2 + $0xc0] sm:$0xff] %v1715
        %1738 = vst [vmem:[#allocation2 + $0xc8] sm:$0xff] %v1717
        %1739 = vst [vmem:[#allocation2 + $0xd0] sm:$0xff] %v1721
        %1740 = vst [vmem:[#allocation2 + $0xd8] sm:$0xff] %v1723
        %1741 = vst [vmem:[#allocation2 + $0xe0] sm:$0xff] %v1727
        %1742 = vst [vmem:[#allocation2 + $0xe8] sm:$0xff] %v1729
        %1743 = vst [vmem:[#allocation2 + $0xf0] sm:$0xff] %v1733
        %1744 = vst [vmem:[#allocation2 + $0xf8] sm:$0xff] %v1735
        %v1745 = vld [vmem:[%s2] sm:$0xff]
        %v1746 = vld [vmem:[#allocation2] sm:$0xff]
        %v1747 = vld [vmem:[#allocation2 + $0x8] sm:$0xff]
        %v1748 = vld [vmem:[#allocation2 + $0x10] sm:$0xff]
        %v1749 = vld [vmem:[#allocation2 + $0x18] sm:$0xff]
        %v1750 = vld [vmem:[#allocation2 + $0x20] sm:$0xff]
        %v1751 = vld [vmem:[#allocation2 + $0x28] sm:$0xff]
        %v1752 = vld [vmem:[#allocation2 + $0x30] sm:$0xff]
        %v1753 = vld [vmem:[#allocation2 + $0x38] sm:$0xff]
        %v1754 = vld [vmem:[#allocation2 + $0x40] sm:$0xff]
        %v1755 = vld [vmem:[#allocation2 + $0x48] sm:$0xff]
        %v1756 = vld [vmem:[#allocation2 + $0x50] sm:$0xff]
        %v1757 = vld [vmem:[#allocation2 + $0x58] sm:$0xff]
        %v1758 = vld [vmem:[#allocation2 + $0x60] sm:$0xff]
        %v1759 = vld [vmem:[#allocation2 + $0x68] sm:$0xff]
        %v1760 = vld [vmem:[#allocation2 + $0x70] sm:$0xff]
        %v1761 = vld [vmem:[#allocation2 + $0x78] sm:$0xff]
        %v1762 = vld [vmem:[#allocation2 + $0x80] sm:$0xff]
        %v1763 = vld [vmem:[#allocation2 + $0x88] sm:$0xff]
        %v1764 = vld [vmem:[#allocation2 + $0x90] sm:$0xff]
        %v1765 = vld [vmem:[#allocation2 + $0x98] sm:$0xff]
        %v1766 = vld [vmem:[#allocation2 + $0xa0] sm:$0xff]
        %v1767 = vld [vmem:[#allocation2 + $0xa8] sm:$0xff]
        %v1768 = vld [vmem:[#allocation2 + $0xb0] sm:$0xff]
        %v1769 = vld [vmem:[#allocation2 + $0xb8] sm:$0xff]
        %v1770 = vld [vmem:[#allocation2 + $0xc0] sm:$0xff]
        %v1771 = vld [vmem:[#allocation2 + $0xc8] sm:$0xff]
        %v1772 = vld [vmem:[#allocation2 + $0xd0] sm:$0xff]
        %v1773 = vld [vmem:[#allocation2 + $0xd8] sm:$0xff]
        %v1774 = vld [vmem:[#allocation2 + $0xe0] sm:$0xff]
        %v1775 = vld [vmem:[#allocation2 + $0xe8] sm:$0xff]
        %v1776 = vld [vmem:[#allocation2 + $0xf0] sm:$0xff]
        %v1777 = vld [vmem:[#allocation2 + $0xf8] sm:$0xff]
        %v1778 = vld [vmem:[%s3] sm:$0xff]
        %1780 = vset.pattern.permute.xlu0 0
        %1781 = vperm.xlu0 %1780, %v1778
        %v1782 = vpop.permute.xlu0 %1781
        %1784 = vmatprep.subr.mxu0 %v1747
        %1785 = vmatpush1.msra.mxu0 %v1746
        %1786 = vmatprep.subr.mxu0 %v1749
        %1787 = vmatpush1.msra.mxu0 %v1748
        %1788 = vmatprep.subr.mxu0 %v1751
        %1789 = vmatpush1.msra.mxu0 %v1750
        %1790 = vmatprep.subr.mxu0 %v1753
        %1791 = vmatpush1.msra.mxu0 %v1752
        %1792 = vmatprep.subr.mxu0 %v1755
        %1793 = vmatpush1.msra.mxu0 %v1754
        %1794 = vmatprep.subr.mxu0 %v1757
        %1795 = vmatpush1.msra.mxu0 %v1756
        %1796 = vmatprep.subr.mxu0 %v1759
        %1797 = vmatpush1.msra.mxu0 %v1758
        %1798 = vmatprep.subr.mxu0 %v1761
        %1799 = vmatpush1.msra.mxu0 %v1760
        %1800 = vmatprep.subr.mxu0 %v1763
        %1801 = vmatpush1.msra.mxu0 %v1762
        %1802 = vmatprep.subr.mxu0 %v1765
        %1803 = vmatpush1.msra.mxu0 %v1764
        %1804 = vmatprep.subr.mxu0 %v1767
        %1805 = vmatpush1.msra.mxu0 %v1766
        %1806 = vmatprep.subr.mxu0 %v1769
        %1807 = vmatpush1.msra.mxu0 %v1768
        %1808 = vmatprep.subr.mxu0 %v1771
        %1809 = vmatpush1.msra.mxu0 %v1770
        %1810 = vmatprep.subr.mxu0 %v1773
        %1811 = vmatpush1.msra.mxu0 %v1772
        %1812 = vmatprep.subr.mxu0 %v1775
        %1813 = vmatpush1.msra.mxu0 %v1774
        %1814 = vmatprep.subr.mxu0 %v1777
        %1815 = vmatpush1.msra.mxu0 %v1776
        %1816 = vmatprep.subr.mxu0 0.0
        %1817 = vmatpush1.msra.mxu0 0.0
        %1818 = vmatprep.subr.mxu0 0.0
        %1819 = vmatpush1.msra.mxu0 0.0
        %1820 = vmatprep.subr.mxu0 0.0
        %1821 = vmatpush1.msra.mxu0 0.0
        %1822 = vmatprep.subr.mxu0 0.0
        %1823 = vmatpush1.msra.mxu0 0.0
        %1824 = vmatprep.subr.mxu0 0.0
        %1825 = vmatpush1.msra.mxu0 0.0
        %1826 = vmatprep.subr.mxu0 0.0
        %1827 = vmatpush1.msra.mxu0 0.0
        %1828 = vmatprep.subr.mxu0 0.0
        %1829 = vmatpush1.msra.mxu0 0.0
        %1830 = vmatprep.subr.mxu0 0.0
        %1831 = vmatpush1.msra.mxu0 0.0
        %1832 = vmatprep.subr.mxu0 0.0
        %1833 = vmatpush1.msra.mxu0 0.0
        %1834 = vmatprep.subr.mxu0 0.0
        %1835 = vmatpush1.msra.mxu0 0.0
        %1836 = vmatprep.subr.mxu0 0.0
        %1837 = vmatpush1.msra.mxu0 0.0
        %1838 = vmatprep.subr.mxu0 0.0
        %1839 = vmatpush1.msra.mxu0 0.0
        %1840 = vmatprep.subr.mxu0 0.0
        %1841 = vmatpush1.msra.mxu0 0.0
        %1842 = vmatprep.subr.mxu0 0.0
        %1843 = vmatpush1.msra.mxu0 0.0
        %1844 = vmatprep.subr.mxu0 0.0
        %1845 = vmatpush1.msra.mxu0 0.0
        %1846 = vmatprep.subr.mxu0 0.0
        %1847 = vmatpush1.msra.mxu0 0.0
        %1848 = vmatprep.mubr.f32.mxu0 0.0
        %1849 = vmatmul.mubr.f32.gmra.mrb[0].mxu0 %v1745
        %v1850 = vpop.f32.mrb[0].mxu0
        %v1851 = vadd.f32 %v1782, %v1850
        %v1852 = vpop.f32.mrb[0].mxu0
        %v1853 = vadd.f32 %v1782, %v1852
        %1854 = vdwg.mxu0
        %1855 = vst [vmem:[%s190] sm:$0xff] %v1851
        %1856 = vst [vmem:[%s190 + $0x8] sm:$0xff] %v1853
        %s1857 = sand.u32 %s115, 1
        %s1858 = scalar_lea.sflag [#allocation4], %s1857
        %s1859 = sand.u32 %s115, 1
        %s1860 = smul.addr %s1859, 16
        %s1861 = scalar_lea.vmem [#allocation3], %s1860
        // Predicated region
        $region37: #{tpu_custom_call.1} parent=35 // pred_check
          %p1862 = pneg %p125
        $region38: #{tpu_custom_call.1} parent=35 // pred_check_branch
          %1864 = sbr.rel (%p1862) target = $region40
        $region39: #{tpu_custom_call.1} parent=35 // pred_region
          %s1866 = ssub.s32 256, 256
          %1867 = vsyncadd %s1858, %s1866
          %s1868 = smul.addr %s18, 2
          %s1869 = smul.addr %s1868, 128
          %s1870 = scalar_lea.hbm %s4, %s1869
          %s1872 = sshll.u32 %s1861, 4
          %s1873 = int_to_ptr.vmem [resolvable:$true] %s1872
          %1875 = dma.vmem_to_hbm [thread:$0]  %s1873, 256, %s1870, %s1858
        $region40: #{tpu_custom_call.1} parent=35 // pred_fallthru
          _
      $region36: #{tpu_custom_call.1} parent=5 // pred_fallthru
        _
      %p1876 = scmp.le.s32.totalorder 2, %s13
      // Predicated region
      $region41: #{tpu_custom_call.1} parent=5 // pred_check
        %p1877 = pneg %p1876
      $region42: #{tpu_custom_call.1} parent=5 // pred_check_branch
        %1879 = sbr.rel (%p1877) target = $region44
      $region43: #{tpu_custom_call.1} parent=5 // pred_region
        %s1880 = ssub.s32 %s13, 2
        // Predicated region
        $region45: #{tpu_custom_call.1} parent=43 // pred_check
          %p1881 = pneg %p131
        $region46: #{tpu_custom_call.1} parent=43 // pred_check_branch
          %1883 = sbr.rel (%p1881) target = $region48
        $region47: #{tpu_custom_call.1} parent=43 // pred_region
          %s1884 = sand.u32 %s116, 1
          %s1885 = scalar_lea.sflag [#allocation4], %s1884
          %s1886 = sand.u32 %s116, 1
          %s1887 = smul.addr %s1886, 16
          %s1888 = scalar_lea.vmem [#allocation3], %s1887
          %1889 = dma.done %s1885, 256
        $region48: #{tpu_custom_call.1} parent=43 // pred_fallthru
          _
      $region44: #{tpu_custom_call.1} parent=5 // pred_fallthru
        _
    $region6: #{tpu_custom_call.1} parent=1 // loop_footer
      %s17 = sadd.s32 1, %s13
    $region7: #{tpu_custom_call.1} parent=1 // loop_footer_branch
      %12 = sbr.rel target = $region3
    $region8: #{tpu_custom_call.1} parent=1 // loop_exit
      _
    %1890 = vsyncpa [#allocation4], 1
    %s1891 = scalar_lea.sflag [#allocation4], 1
    %1892 = vsyncpa %s1891, 1

</llo_original>
